<compile_context>
chip_gen: v6e
topology: v6e:2x2x1
jax: 0.10.0
libtpu: 0.0.40
codegen_flags: <defaults>
</compile_context>

<pallas_src>
import functools

import jax
import jax.numpy as jnp
from jax.experimental import pallas as pl
from jax.experimental.pallas import tpu as pltpu


def _avg_pool_kernel(inv_area, block_b, x_ref, ph_ref, pwT_ref, o_ref):
    """x_ref: (B, Hp, Wp), ph_ref: (OH, Hp), pwT_ref: (Wp, OW), o_ref: (B, OH, OW)."""
    ph = ph_ref[...]        # (OH, Hp)  entries in {0, 1}
    pw = pwT_ref[...]       # (Wp, OW)  entries in {0, 1}
    # Static unrolled loop over the B planes of this block: two small 2-D MXU
    # matmuls per plane compute the rectangular window sums (f32 accumulation),
    # then one scalar scale on the VPU turns sums into averages.
    for b in range(block_b):
        xb = x_ref[b]                                               # (Hp, Wp)
        t = jnp.dot(xb, pw, preferred_element_type=jnp.float32)     # (Hp, OW)
        acc = jnp.dot(ph, t, preferred_element_type=jnp.float32)    # (OH, OW)
        o_ref[b] = (acc * inv_area).astype(o_ref.dtype)


def _pair(v):
    if isinstance(v, (tuple, list)):
        return int(v[0]), int(v[1])
    return int(v), int(v)


def _pick_block_rows(nc, hp, wp, itemsize):
    # Keep each input buffer <= ~2 MiB (Pallas double-buffers it) and cap the
    # static unroll length of the per-plane loop.
    budget_rows = max(1, (2 << 20) // max(1, hp * wp * itemsize))
    cap = max(1, min(nc, budget_rows, 16))
    for b in range(cap, 0, -1):
        if nc % b == 0:
            return b
    return 1


def avg_pool2d(x, kernel_size, stride=None, padding=0):
    """Forward of torch.nn.AvgPool2d (defaults) on an NCHW array."""
    kH, kW = _pair(kernel_size)
    sH, sW = _pair(stride if stride is not None else kernel_size)
    pH, pW = _pair(padding)
    assert pH <= kH // 2 and pW <= kW // 2, "padding must be <= kernel_size / 2"

    N, C, H, W = x.shape
    OH = (H + 2 * pH - kH) // sH + 1
    OW = (W + 2 * pW - kW) // sW + 1
    assert OH > 0 and OW > 0, "output size must be positive"

    Hp, Wp = H + 2 * pH, W + 2 * pW
    xpad = jnp.pad(x, ((0, 0), (0, 0), (pH, pH), (pW, pW)))
    x2 = xpad.reshape(N * C, Hp, Wp)

    # Separable window-selection matrices (entries are exactly 0 / 1).
    oh = jnp.arange(OH) * sH
    ph = ((jnp.arange(Hp)[None, :] >= oh[:, None])
          & (jnp.arange(Hp)[None, :] < (oh + kH)[:, None])).astype(x.dtype)    # (OH, Hp)
    ow = jnp.arange(OW) * sW
    pwT = ((jnp.arange(Wp)[:, None] >= ow[None, :])
           & (jnp.arange(Wp)[:, None] < (ow + kW)[None, :])).astype(x.dtype)   # (Wp, OW)

    NC = N * C
    B = _pick_block_rows(NC, Hp, Wp, x.dtype.itemsize)
    inv_area = 1.0 / float(kH * kW)

    out = pl.pallas_call(
        functools.partial(_avg_pool_kernel, inv_area, B),
        out_shape=jax.ShapeDtypeStruct((NC, OH, OW), x.dtype),
        grid_spec=pltpu.PrefetchScalarGridSpec(
            num_scalar_prefetch=0,
            grid=(NC // B,),
            in_specs=[
                pl.BlockSpec((B, Hp, Wp), lambda i: (i, 0, 0)),
                pl.BlockSpec((OH, Hp), lambda i: (0, 0)),
                pl.BlockSpec((Wp, OW), lambda i: (0, 0)),
            ],
            out_specs=pl.BlockSpec((B, OH, OW), lambda i: (i, 0, 0)),
        ),
        compiler_params=pltpu.CompilerParams(
            dimension_semantics=("parallel",),
        ),
    )(x2, ph, pwT)

    return out.reshape(N, C, OH, OW)


class AvgPool2d:
    """JAX/Pallas port of the PyTorch AvgPool2d wrapper module."""

    def __init__(self, kernel_size, stride, padding, **kwargs):
        self.kernel_size = kernel_size
        self.stride = stride
        self.padding = padding

    def __call__(self, x):
        return avg_pool2d(x, self.kernel_size, self.stride, self.padding)


if __name__ == "__main__":
    key = jax.random.PRNGKey(0)
    x = jax.random.normal(key, (2, 4, 16, 16), dtype=jnp.float32)

    # Typical NAS-cell config: 3x3 avg pool, stride 2, padding 1.
    pool = AvgPool2d(kernel_size=3, stride=2, padding=1)
    y = jax.block_until_ready(pool(x))
    assert y.shape == (2, 4, 8, 8), y.shape
    ref = jax.lax.reduce_window(
        x, 0.0, jax.lax.add,
        window_dimensions=(1, 1, 3, 3),
        window_strides=(1, 1, 2, 2),
        padding=((0, 0), (0, 0), (1, 1), (1, 1)),
    ) / 9.0
    assert jnp.allclose(y, ref, atol=1e-5, rtol=1e-5), "3x3/s2/p1 mismatch"

    # Second config: 2x2 avg pool, stride 1, no padding.
    pool2 = AvgPool2d(kernel_size=2, stride=1, padding=0)
    y2 = jax.block_until_ready(pool2(x))
    assert y2.shape == (2, 4, 15, 15), y2.shape
    ref2 = jax.lax.reduce_window(
        x, 0.0, jax.lax.add,
        window_dimensions=(1, 1, 2, 2),
        window_strides=(1, 1, 1, 1),
        padding=((0, 0), (0, 0), (0, 0), (0, 0)),
    ) / 4.0
    assert jnp.allclose(y2, ref2, atol=1e-5, rtol=1e-5), "2x2/s1/p0 mismatch"

    print("KERNEL_OK")
</pallas_src>

<mosaic_0001>
module attributes {stable_mosaic.version = 11 : i64} {
  func.func @_avg_pool_kernel(%arg0: i32, %arg1: memref<8x18x18xf32, #tpu.memory_space<vmem>>, %arg2: memref<8x18xf32, #tpu.memory_space<vmem>>, %arg3: memref<18x8xf32, #tpu.memory_space<vmem>>, %arg4: memref<8x8x8xf32, #tpu.memory_space<vmem>>) attributes {dimension_semantics = [#tpu.dimension_semantics<parallel>], iteration_bounds = array<i64: 1>, scalar_prefetch = 0 : i64, scratch_operands = 0 : i64, tpu.core_type = #tpu.core_type<tc>, window_params = [{transform_indices = @transform_0, window_bounds = array<i64: 8, 18, 18>}, {pipeline_mode = #tpu.pipeline_mode<synchronous>, transform_indices = @transform_1, window_bounds = array<i64: 8, 18>}, {pipeline_mode = #tpu.pipeline_mode<synchronous>, transform_indices = @transform_2, window_bounds = array<i64: 18, 8>}, {transform_indices = @transform_3, window_bounds = array<i64: 8, 8, 8>}]} {
    %c0 = arith.constant 0 : index
    %c0_0 = arith.constant 0 : index
    %0 = vector.load %arg2[%c0, %c0_0] : memref<8x18xf32, #tpu.memory_space<vmem>>, vector<8x18xf32>
    %c0_1 = arith.constant 0 : index
    %c0_2 = arith.constant 0 : index
    %1 = vector.load %arg3[%c0_1, %c0_2] : memref<18x8xf32, #tpu.memory_space<vmem>>, vector<18x8xf32>
    %c0_3 = arith.constant 0 : index
    %c0_4 = arith.constant 0 : index
    %c0_5 = arith.constant 0 : index
    %2 = vector.load %arg1[%c0_3, %c0_4, %c0_5] : memref<8x18x18xf32, #tpu.memory_space<vmem>>, vector<1x18x18xf32>
    %3 = vector.shape_cast %2 : vector<1x18x18xf32> to vector<18x18xf32>
    %cst = arith.constant dense<0.000000e+00> : vector<18x8xf32>
    %4 = tpu.matmul %3, %1, %cst {dimension_numbers = #tpu.dot_dimension_numbers<[1], [0], [0], [1], [0, 0, 1, 1], [], []>} : vector<18x18xf32>, vector<18x8xf32>, vector<18x8xf32> -> vector<18x8xf32>
    %cst_6 = arith.constant dense<0.000000e+00> : vector<8x8xf32>
    %5 = tpu.matmul %0, %4, %cst_6 {dimension_numbers = #tpu.dot_dimension_numbers<[1], [0], [0], [1], [0, 0, 1, 1], [], []>} : vector<8x18xf32>, vector<18x8xf32>, vector<8x8xf32> -> vector<8x8xf32>
    %cst_7 = arith.constant 0.111111112 : f32
    %6 = vector.broadcast %cst_7 : f32 to vector<8x8xf32>
    %7 = arith.mulf %5, %6 : vector<8x8xf32>
    %c0_8 = arith.constant 0 : index
    %c0_9 = arith.constant 0 : index
    %c0_10 = arith.constant 0 : index
    %8 = vector.load %arg4[%c0_8, %c0_9, %c0_10] : memref<8x8x8xf32, #tpu.memory_space<vmem>>, vector<1x8x8xf32>
    %9 = vector.shape_cast %8 : vector<1x8x8xf32> to vector<8x8xf32>
    %10 = vector.shape_cast %7 : vector<8x8xf32> to vector<1x8x8xf32>
    tpu.vector_store %arg4[%c0_8, %c0_9, %c0_10], %10 {strides = array<i32>} : memref<8x8x8xf32, #tpu.memory_space<vmem>>, vector<1x8x8xf32>,
    %c1 = arith.constant 1 : index
    %c0_11 = arith.constant 0 : index
    %c0_12 = arith.constant 0 : index
    %11 = vector.load %arg1[%c1, %c0_11, %c0_12] : memref<8x18x18xf32, #tpu.memory_space<vmem>>, vector<1x18x18xf32>
    %12 = vector.shape_cast %11 : vector<1x18x18xf32> to vector<18x18xf32>
    %cst_13 = arith.constant dense<0.000000e+00> : vector<18x8xf32>
    %13 = tpu.matmul %12, %1, %cst_13 {dimension_numbers = #tpu.dot_dimension_numbers<[1], [0], [0], [1], [0, 0, 1, 1], [], []>} : vector<18x18xf32>, vector<18x8xf32>, vector<18x8xf32> -> vector<18x8xf32>
    %cst_14 = arith.constant dense<0.000000e+00> : vector<8x8xf32>
    %14 = tpu.matmul %0, %13, %cst_14 {dimension_numbers = #tpu.dot_dimension_numbers<[1], [0], [0], [1], [0, 0, 1, 1], [], []>} : vector<8x18xf32>, vector<18x8xf32>, vector<8x8xf32> -> vector<8x8xf32>
    %cst_15 = arith.constant 0.111111112 : f32
    %15 = vector.broadcast %cst_15 : f32 to vector<8x8xf32>
    %16 = arith.mulf %14, %15 : vector<8x8xf32>
    %c1_16 = arith.constant 1 : index
    %c0_17 = arith.constant 0 : index
    %c0_18 = arith.constant 0 : index
    %17 = vector.load %arg4[%c1_16, %c0_17, %c0_18] : memref<8x8x8xf32, #tpu.memory_space<vmem>>, vector<1x8x8xf32>
    %18 = vector.shape_cast %17 : vector<1x8x8xf32> to vector<8x8xf32>
    %19 = vector.shape_cast %16 : vector<8x8xf32> to vector<1x8x8xf32>
    tpu.vector_store %arg4[%c1_16, %c0_17, %c0_18], %19 {strides = array<i32>} : memref<8x8x8xf32, #tpu.memory_space<vmem>>, vector<1x8x8xf32>,
    %c2 = arith.constant 2 : index
    %c0_19 = arith.constant 0 : index
    %c0_20 = arith.constant 0 : index
    %20 = vector.load %arg1[%c2, %c0_19, %c0_20] : memref<8x18x18xf32, #tpu.memory_space<vmem>>, vector<1x18x18xf32>
    %21 = vector.shape_cast %20 : vector<1x18x18xf32> to vector<18x18xf32>
    %cst_21 = arith.constant dense<0.000000e+00> : vector<18x8xf32>
    %22 = tpu.matmul %21, %1, %cst_21 {dimension_numbers = #tpu.dot_dimension_numbers<[1], [0], [0], [1], [0, 0, 1, 1], [], []>} : vector<18x18xf32>, vector<18x8xf32>, vector<18x8xf32> -> vector<18x8xf32>
    %cst_22 = arith.constant dense<0.000000e+00> : vector<8x8xf32>
    %23 = tpu.matmul %0, %22, %cst_22 {dimension_numbers = #tpu.dot_dimension_numbers<[1], [0], [0], [1], [0, 0, 1, 1], [], []>} : vector<8x18xf32>, vector<18x8xf32>, vector<8x8xf32> -> vector<8x8xf32>
    %cst_23 = arith.constant 0.111111112 : f32
    %24 = vector.broadcast %cst_23 : f32 to vector<8x8xf32>
    %25 = arith.mulf %23, %24 : vector<8x8xf32>
    %c2_24 = arith.constant 2 : index
    %c0_25 = arith.constant 0 : index
    %c0_26 = arith.constant 0 : index
    %26 = vector.load %arg4[%c2_24, %c0_25, %c0_26] : memref<8x8x8xf32, #tpu.memory_space<vmem>>, vector<1x8x8xf32>
    %27 = vector.shape_cast %26 : vector<1x8x8xf32> to vector<8x8xf32>
    %28 = vector.shape_cast %25 : vector<8x8xf32> to vector<1x8x8xf32>
    tpu.vector_store %arg4[%c2_24, %c0_25, %c0_26], %28 {strides = array<i32>} : memref<8x8x8xf32, #tpu.memory_space<vmem>>, vector<1x8x8xf32>,
    %c3 = arith.constant 3 : index
    %c0_27 = arith.constant 0 : index
    %c0_28 = arith.constant 0 : index
    %29 = vector.load %arg1[%c3, %c0_27, %c0_28] : memref<8x18x18xf32, #tpu.memory_space<vmem>>, vector<1x18x18xf32>
    %30 = vector.shape_cast %29 : vector<1x18x18xf32> to vector<18x18xf32>
    %cst_29 = arith.constant dense<0.000000e+00> : vector<18x8xf32>
    %31 = tpu.matmul %30, %1, %cst_29 {dimension_numbers = #tpu.dot_dimension_numbers<[1], [0], [0], [1], [0, 0, 1, 1], [], []>} : vector<18x18xf32>, vector<18x8xf32>, vector<18x8xf32> -> vector<18x8xf32>
    %cst_30 = arith.constant dense<0.000000e+00> : vector<8x8xf32>
    %32 = tpu.matmul %0, %31, %cst_30 {dimension_numbers = #tpu.dot_dimension_numbers<[1], [0], [0], [1], [0, 0, 1, 1], [], []>} : vector<8x18xf32>, vector<18x8xf32>, vector<8x8xf32> -> vector<8x8xf32>
    %cst_31 = arith.constant 0.111111112 : f32
    %33 = vector.broadcast %cst_31 : f32 to vector<8x8xf32>
    %34 = arith.mulf %32, %33 : vector<8x8xf32>
    %c3_32 = arith.constant 3 : index
    %c0_33 = arith.constant 0 : index
    %c0_34 = arith.constant 0 : index
    %35 = vector.load %arg4[%c3_32, %c0_33, %c0_34] : memref<8x8x8xf32, #tpu.memory_space<vmem>>, vector<1x8x8xf32>
    %36 = vector.shape_cast %35 : vector<1x8x8xf32> to vector<8x8xf32>
    %37 = vector.shape_cast %34 : vector<8x8xf32> to vector<1x8x8xf32>
    tpu.vector_store %arg4[%c3_32, %c0_33, %c0_34], %37 {strides = array<i32>} : memref<8x8x8xf32, #tpu.memory_space<vmem>>, vector<1x8x8xf32>,
    %c4 = arith.constant 4 : index
    %c0_35 = arith.constant 0 : index
    %c0_36 = arith.constant 0 : index
    %38 = vector.load %arg1[%c4, %c0_35, %c0_36] : memref<8x18x18xf32, #tpu.memory_space<vmem>>, vector<1x18x18xf32>
    %39 = vector.shape_cast %38 : vector<1x18x18xf32> to vector<18x18xf32>
    %cst_37 = arith.constant dense<0.000000e+00> : vector<18x8xf32>
    %40 = tpu.matmul %39, %1, %cst_37 {dimension_numbers = #tpu.dot_dimension_numbers<[1], [0], [0], [1], [0, 0, 1, 1], [], []>} : vector<18x18xf32>, vector<18x8xf32>, vector<18x8xf32> -> vector<18x8xf32>
    %cst_38 = arith.constant dense<0.000000e+00> : vector<8x8xf32>
    %41 = tpu.matmul %0, %40, %cst_38 {dimension_numbers = #tpu.dot_dimension_numbers<[1], [0], [0], [1], [0, 0, 1, 1], [], []>} : vector<8x18xf32>, vector<18x8xf32>, vector<8x8xf32> -> vector<8x8xf32>
    %cst_39 = arith.constant 0.111111112 : f32
    %42 = vector.broadcast %cst_39 : f32 to vector<8x8xf32>
    %43 = arith.mulf %41, %42 : vector<8x8xf32>
    %c4_40 = arith.constant 4 : index
    %c0_41 = arith.constant 0 : index
    %c0_42 = arith.constant 0 : index
    %44 = vector.load %arg4[%c4_40, %c0_41, %c0_42] : memref<8x8x8xf32, #tpu.memory_space<vmem>>, vector<1x8x8xf32>
    %45 = vector.shape_cast %44 : vector<1x8x8xf32> to vector<8x8xf32>
    %46 = vector.shape_cast %43 : vector<8x8xf32> to vector<1x8x8xf32>
    tpu.vector_store %arg4[%c4_40, %c0_41, %c0_42], %46 {strides = array<i32>} : memref<8x8x8xf32, #tpu.memory_space<vmem>>, vector<1x8x8xf32>,
    %c5 = arith.constant 5 : index
    %c0_43 = arith.constant 0 : index
    %c0_44 = arith.constant 0 : index
    %47 = vector.load %arg1[%c5, %c0_43, %c0_44] : memref<8x18x18xf32, #tpu.memory_space<vmem>>, vector<1x18x18xf32>
    %48 = vector.shape_cast %47 : vector<1x18x18xf32> to vector<18x18xf32>
    %cst_45 = arith.constant dense<0.000000e+00> : vector<18x8xf32>
    %49 = tpu.matmul %48, %1, %cst_45 {dimension_numbers = #tpu.dot_dimension_numbers<[1], [0], [0], [1], [0, 0, 1, 1], [], []>} : vector<18x18xf32>, vector<18x8xf32>, vector<18x8xf32> -> vector<18x8xf32>
    %cst_46 = arith.constant dense<0.000000e+00> : vector<8x8xf32>
    %50 = tpu.matmul %0, %49, %cst_46 {dimension_numbers = #tpu.dot_dimension_numbers<[1], [0], [0], [1], [0, 0, 1, 1], [], []>} : vector<8x18xf32>, vector<18x8xf32>, vector<8x8xf32> -> vector<8x8xf32>
    %cst_47 = arith.constant 0.111111112 : f32
    %51 = vector.broadcast %cst_47 : f32 to vector<8x8xf32>
    %52 = arith.mulf %50, %51 : vector<8x8xf32>
    %c5_48 = arith.constant 5 : index
    %c0_49 = arith.constant 0 : index
    %c0_50 = arith.constant 0 : index
    %53 = vector.load %arg4[%c5_48, %c0_49, %c0_50] : memref<8x8x8xf32, #tpu.memory_space<vmem>>, vector<1x8x8xf32>
    %54 = vector.shape_cast %53 : vector<1x8x8xf32> to vector<8x8xf32>
    %55 = vector.shape_cast %52 : vector<8x8xf32> to vector<1x8x8xf32>
    tpu.vector_store %arg4[%c5_48, %c0_49, %c0_50], %55 {strides = array<i32>} : memref<8x8x8xf32, #tpu.memory_space<vmem>>, vector<1x8x8xf32>,
    %c6 = arith.constant 6 : index
    %c0_51 = arith.constant 0 : index
    %c0_52 = arith.constant 0 : index
    %56 = vector.load %arg1[%c6, %c0_51, %c0_52] : memref<8x18x18xf32, #tpu.memory_space<vmem>>, vector<1x18x18xf32>
    %57 = vector.shape_cast %56 : vector<1x18x18xf32> to vector<18x18xf32>
    %cst_53 = arith.constant dense<0.000000e+00> : vector<18x8xf32>
    %58 = tpu.matmul %57, %1, %cst_53 {dimension_numbers = #tpu.dot_dimension_numbers<[1], [0], [0], [1], [0, 0, 1, 1], [], []>} : vector<18x18xf32>, vector<18x8xf32>, vector<18x8xf32> -> vector<18x8xf32>
    %cst_54 = arith.constant dense<0.000000e+00> : vector<8x8xf32>
    %59 = tpu.matmul %0, %58, %cst_54 {dimension_numbers = #tpu.dot_dimension_numbers<[1], [0], [0], [1], [0, 0, 1, 1], [], []>} : vector<8x18xf32>, vector<18x8xf32>, vector<8x8xf32> -> vector<8x8xf32>
    %cst_55 = arith.constant 0.111111112 : f32
    %60 = vector.broadcast %cst_55 : f32 to vector<8x8xf32>
    %61 = arith.mulf %59, %60 : vector<8x8xf32>
    %c6_56 = arith.constant 6 : index
    %c0_57 = arith.constant 0 : index
    %c0_58 = arith.constant 0 : index
    %62 = vector.load %arg4[%c6_56, %c0_57, %c0_58] : memref<8x8x8xf32, #tpu.memory_space<vmem>>, vector<1x8x8xf32>
    %63 = vector.shape_cast %62 : vector<1x8x8xf32> to vector<8x8xf32>
    %64 = vector.shape_cast %61 : vector<8x8xf32> to vector<1x8x8xf32>
    tpu.vector_store %arg4[%c6_56, %c0_57, %c0_58], %64 {strides = array<i32>} : memref<8x8x8xf32, #tpu.memory_space<vmem>>, vector<1x8x8xf32>,
    %c7 = arith.constant 7 : index
    %c0_59 = arith.constant 0 : index
    %c0_60 = arith.constant 0 : index
    %65 = vector.load %arg1[%c7, %c0_59, %c0_60] : memref<8x18x18xf32, #tpu.memory_space<vmem>>, vector<1x18x18xf32>
    %66 = vector.shape_cast %65 : vector<1x18x18xf32> to vector<18x18xf32>
    %cst_61 = arith.constant dense<0.000000e+00> : vector<18x8xf32>
    %67 = tpu.matmul %66, %1, %cst_61 {dimension_numbers = #tpu.dot_dimension_numbers<[1], [0], [0], [1], [0, 0, 1, 1], [], []>} : vector<18x18xf32>, vector<18x8xf32>, vector<18x8xf32> -> vector<18x8xf32>
    %cst_62 = arith.constant dense<0.000000e+00> : vector<8x8xf32>
    %68 = tpu.matmul %0, %67, %cst_62 {dimension_numbers = #tpu.dot_dimension_numbers<[1], [0], [0], [1], [0, 0, 1, 1], [], []>} : vector<8x18xf32>, vector<18x8xf32>, vector<8x8xf32> -> vector<8x8xf32>
    %cst_63 = arith.constant 0.111111112 : f32
    %69 = vector.broadcast %cst_63 : f32 to vector<8x8xf32>
    %70 = arith.mulf %68, %69 : vector<8x8xf32>
    %c7_64 = arith.constant 7 : index
    %c0_65 = arith.constant 0 : index
    %c0_66 = arith.constant 0 : index
    %71 = vector.load %arg4[%c7_64, %c0_65, %c0_66] : memref<8x8x8xf32, #tpu.memory_space<vmem>>, vector<1x8x8xf32>
    %72 = vector.shape_cast %71 : vector<1x8x8xf32> to vector<8x8xf32>
    %73 = vector.shape_cast %70 : vector<8x8xf32> to vector<1x8x8xf32>
    tpu.vector_store %arg4[%c7_64, %c0_65, %c0_66], %73 {strides = array<i32>} : memref<8x8x8xf32, #tpu.memory_space<vmem>>, vector<1x8x8xf32>,
    return
  }
  func.func @transform_0(%arg0: i32) -> (i32, i32, i32) {
    %c0_i32 = arith.constant 0 : i32
    %c0_i32_0 = arith.constant 0 : i32
    %c0_i32_1 = arith.constant 0 : i32
    return %arg0, %c0_i32, %c0_i32_0 : i32, i32, i32
  }
  func.func @transform_1(%arg0: i32) -> (i32, i32) {
    %c0_i32 = arith.constant 0 : i32
    %c0_i32_0 = arith.constant 0 : i32
    %c0_i32_1 = arith.constant 0 : i32
    return %c0_i32, %c0_i32_0 : i32, i32
  }
  func.func @transform_2(%arg0: i32) -> (i32, i32) {
    %c0_i32 = arith.constant 0 : i32
    %c0_i32_0 = arith.constant 0 : i32
    %c0_i32_1 = arith.constant 0 : i32
    return %c0_i32, %c0_i32_0 : i32, i32
  }
  func.func @transform_3(%arg0: i32) -> (i32, i32, i32) {
    %c0_i32 = arith.constant 0 : i32
    %c0_i32_0 = arith.constant 0 : i32
    %c0_i32_1 = arith.constant 0 : i32
    return %arg0, %c0_i32, %c0_i32_0 : i32, i32, i32
  }
}

</mosaic_0001>

<llo_original>
// kernel: tpu_custom_call.1
$region0: #{tpu_custom_call.1}
  #allocation0 [shape = 'u32[]', space=smem, size = 0x4, offset = 0x4, fixed_abs, tag = 'smem constant byte address 0x4 - core index']
  #allocation1 [shape = 'u32[144,128]{1,0:T(1,128)}', space=vmem, size = 0x12000, scoped, tag = 'internal scratch']
  %s0 = inlined_call_operand.vmem [shape: f32[8,18,18], index: 0, kind: input, shape index: {}]
  %s1 = inlined_call_operand.vmem [shape: f32[8,18], index: 1, kind: input, shape index: {}]
  %s2 = inlined_call_operand.vmem [shape: f32[18,8], index: 2, kind: input, shape index: {}]
  %s3 = inlined_call_operand.hbm [shape: f32[8,8,8], index: 3, kind: output, shape index: {}]
  %s4 = sld [smem:[#allocation0]]
  $region22: #{tpu_custom_call.1} parent=0
    _
  %s6 = ssub.s32 1, %s4
  %s7 = scalar_select 0, %s6, %s4
  $region1: #{tpu_custom_call.1} parent=0
    #allocation2 [shape = 'u8[32768]{0}', space=vmem, size = 0x8000, scoped, tag = 'output window, operand 0, single buffered']
    #allocation3 [shape = 's32[1]{0}', space=sflag, size = 0x4, scoped, tag = 'scoped memory for tpu_custom_call.1']
    %8 = vsyncpa [#allocation3], 0
    // Predicated region
    $region2: #{tpu_custom_call.1} parent=1 // pred_check
      _
    $region3: #{tpu_custom_call.1} parent=1 // pred_check_branch
      %10 = sbr.rel (0) target = $region5
    $region4: #{tpu_custom_call.1} parent=1 // pred_region
      _
    $region5: #{tpu_custom_call.1} parent=1 // pred_fallthru
      _
    // Predicated region
    $region6: #{tpu_custom_call.1} parent=1 // pred_check
      _
    $region7: #{tpu_custom_call.1} parent=1 // pred_check_branch
      %12 = sbr.rel (0) target = $region9
    $region8: #{tpu_custom_call.1} parent=1 // pred_region
      _
    $region9: #{tpu_custom_call.1} parent=1 // pred_fallthru
      _
    // Predicated region
    $region10: #{tpu_custom_call.1} parent=1 // pred_check
      _
    $region11: #{tpu_custom_call.1} parent=1 // pred_check_branch
      %14 = sbr.rel (0) target = $region13
    $region12: #{tpu_custom_call.1} parent=1 // pred_region
      _
    $region13: #{tpu_custom_call.1} parent=1 // pred_fallthru
      _
    %v15 = vld [vmem:[%s1] sm:$0xff]
    %v16 = vld [vmem:[%s2] sm:$0xff]
    %v17 = vld [vmem:[%s2 + $0x8] sm:$0xff]
    %v18 = vld [vmem:[%s2 + $0x10] sm:$0x3]
    %v19 = vld [vmem:[%s0] sm:$0xff]
    %v20 = vld [vmem:[%s0 + $0x8] sm:$0xff]
    %v21 = vld [vmem:[%s0 + $0x10] sm:$0x3]
    %vm22 = vcmask 146432
    %v24 = vsel %vm22, %v19, 0
    %v27 = vsel %vm22, %v20, 0
    %v30 = vsel %vm22, %v21, 0
    %vm32 = vcmask 1041408
    %v34 = vsel %vm32, %v18, 0
    %36 = vmatprep.subr.mxu0 0.0
    %37 = vmatpush1.msra.mxu0 0.0
    %38 = vmatprep.subr.mxu0 0.0
    %39 = vmatpush1.msra.mxu0 0.0
    %40 = vmatprep.subr.mxu0 0.0
    %41 = vmatpush1.msra.mxu0 0.0
    %42 = vmatprep.subr.mxu0 0.0
    %43 = vmatpush1.msra.mxu0 0.0
    %44 = vmatprep.subr.mxu0 0.0
    %45 = vmatpush1.msra.mxu0 0.0
    %46 = vmatprep.subr.mxu0 0.0
    %47 = vmatpush1.msra.mxu0 0.0
    %48 = vmatprep.subr.mxu0 0.0
    %49 = vmatpush1.msra.mxu0 0.0
    %50 = vmatprep.subr.mxu0 0.0
    %51 = vmatpush1.msra.mxu0 0.0
    %52 = vmatprep.subr.mxu0 0.0
    %53 = vmatpush1.msra.mxu0 0.0
    %54 = vmatprep.subr.mxu0 0.0
    %55 = vmatpush1.msra.mxu0 0.0
    %56 = vmatprep.subr.mxu0 0.0
    %57 = vmatpush1.msra.mxu0 0.0
    %58 = vmatprep.subr.mxu0 0.0
    %59 = vmatpush1.msra.mxu0 0.0
    %60 = vmatprep.subr.mxu0 0.0
    %61 = vmatpush1.msra.mxu0 0.0
    %62 = vmatprep.subr.mxu0 0.0
    %63 = vmatpush1.msra.mxu0 %v34
    %64 = vmatprep.subr.mxu0 0.0
    %65 = vmatpush1.msra.mxu0 %v17
    %66 = vmatprep.subr.mxu0 0.0
    %67 = vmatpush1.msra.mxu0 %v16
    %68 = vmatprep.subr.mxu0 0.0
    %69 = vmatpush2.msra.mxu0 0.0
    %70 = vmatprep.subr.mxu0 0.0
    %71 = vmatpush2.msra.mxu0 0.0
    %72 = vmatprep.subr.mxu0 0.0
    %73 = vmatpush2.msra.mxu0 0.0
    %74 = vmatprep.subr.mxu0 0.0
    %75 = vmatpush2.msra.mxu0 0.0
    %76 = vmatprep.subr.mxu0 0.0
    %77 = vmatpush2.msra.mxu0 0.0
    %78 = vmatprep.subr.mxu0 0.0
    %79 = vmatpush2.msra.mxu0 0.0
    %80 = vmatprep.subr.mxu0 0.0
    %81 = vmatpush2.msra.mxu0 0.0
    %82 = vmatprep.subr.mxu0 0.0
    %83 = vmatpush2.msra.mxu0 0.0
    %84 = vmatprep.subr.mxu0 0.0
    %85 = vmatpush2.msra.mxu0 0.0
    %86 = vmatprep.subr.mxu0 0.0
    %87 = vmatpush2.msra.mxu0 0.0
    %88 = vmatprep.subr.mxu0 0.0
    %89 = vmatpush2.msra.mxu0 0.0
    %90 = vmatprep.subr.mxu0 0.0
    %91 = vmatpush2.msra.mxu0 0.0
    %92 = vmatprep.subr.mxu0 0.0
    %93 = vmatpush2.msra.mxu0 0.0
    %94 = vmatprep.subr.mxu0 0.0
    %95 = vmatpush2.msra.mxu0 0.0
    %96 = vmatprep.subr.mxu0 0.0
    %97 = vmatpush2.msra.mxu0 0.0
    %98 = vmatprep.subr.mxu0 0.0
    %99 = vmatpush2.msra.mxu0 0.0
    %100 = vmatprep.mubr.f32.mxu0 0.0
    %101 = vmatmul.mubr.f32.gmra.mxu0 %v24
    %v102 = vpop.f32.mrf.mxu0
    %v103 = vadd.f32 0.0, %v102
    %v104 = vpop.f32.mrf.mxu0
    %105 = vmatprep.mubr.f32.mxu0 0.0
    %106 = vmatmul.mubr.f32.gmra.mxu0 %v27
    %v107 = vpop.f32.mrf.mxu0
    %v108 = vadd.f32 0.0, %v107
    %v109 = vpop.f32.mrf.mxu0
    %110 = vmatprep.mubr.f32.mxu0 0.0
    %111 = vmatmul.mubr.f32.gmra.mxu0 %v30
    %v112 = vpop.f32.mrf.mxu0
    %v113 = vadd.f32 0.0, %v112
    %v114 = vpop.f32.mrf.mxu0
    %115 = vdwg.mxu0
    %v117 = vsel %vm22, %v15, 0
    %v120 = vsel %vm32, %v113, 0
    %122 = vmatprep.subr.mxu0 0.0
    %123 = vmatpush1.msra.mxu0 0.0
    %124 = vmatprep.subr.mxu0 0.0
    %125 = vmatpush1.msra.mxu0 0.0
    %126 = vmatprep.subr.mxu0 0.0
    %127 = vmatpush1.msra.mxu0 0.0
    %128 = vmatprep.subr.mxu0 0.0
    %129 = vmatpush1.msra.mxu0 0.0
    %130 = vmatprep.subr.mxu0 0.0
    %131 = vmatpush1.msra.mxu0 0.0
    %132 = vmatprep.subr.mxu0 0.0
    %133 = vmatpush1.msra.mxu0 0.0
    %134 = vmatprep.subr.mxu0 0.0
    %135 = vmatpush1.msra.mxu0 0.0
    %136 = vmatprep.subr.mxu0 0.0
    %137 = vmatpush1.msra.mxu0 0.0
    %138 = vmatprep.subr.mxu0 0.0
    %139 = vmatpush1.msra.mxu0 0.0
    %140 = vmatprep.subr.mxu0 0.0
    %141 = vmatpush1.msra.mxu0 0.0
    %142 = vmatprep.subr.mxu0 0.0
    %143 = vmatpush1.msra.mxu0 0.0
    %144 = vmatprep.subr.mxu0 0.0
    %145 = vmatpush1.msra.mxu0 0.0
    %146 = vmatprep.subr.mxu0 0.0
    %147 = vmatpush1.msra.mxu0 0.0
    %148 = vmatprep.subr.mxu0 0.0
    %149 = vmatpush1.msra.mxu0 %v120
    %150 = vmatprep.subr.mxu0 0.0
    %151 = vmatpush1.msra.mxu0 %v108
    %152 = vmatprep.subr.mxu0 0.0
    %153 = vmatpush1.msra.mxu0 %v103
    %154 = vmatprep.subr.mxu0 0.0
    %155 = vmatpush2.msra.mxu0 0.0
    %156 = vmatprep.subr.mxu0 0.0
    %157 = vmatpush2.msra.mxu0 0.0
    %158 = vmatprep.subr.mxu0 0.0
    %159 = vmatpush2.msra.mxu0 0.0
    %160 = vmatprep.subr.mxu0 0.0
    %161 = vmatpush2.msra.mxu0 0.0
    %162 = vmatprep.subr.mxu0 0.0
    %163 = vmatpush2.msra.mxu0 0.0
    %164 = vmatprep.subr.mxu0 0.0
    %165 = vmatpush2.msra.mxu0 0.0
    %166 = vmatprep.subr.mxu0 0.0
    %167 = vmatpush2.msra.mxu0 0.0
    %168 = vmatprep.subr.mxu0 0.0
    %169 = vmatpush2.msra.mxu0 0.0
    %170 = vmatprep.subr.mxu0 0.0
    %171 = vmatpush2.msra.mxu0 0.0
    %172 = vmatprep.subr.mxu0 0.0
    %173 = vmatpush2.msra.mxu0 0.0
    %174 = vmatprep.subr.mxu0 0.0
    %175 = vmatpush2.msra.mxu0 0.0
    %176 = vmatprep.subr.mxu0 0.0
    %177 = vmatpush2.msra.mxu0 0.0
    %178 = vmatprep.subr.mxu0 0.0
    %179 = vmatpush2.msra.mxu0 0.0
    %180 = vmatprep.subr.mxu0 0.0
    %181 = vmatpush2.msra.mxu0 0.0
    %182 = vmatprep.subr.mxu0 0.0
    %183 = vmatpush2.msra.mxu0 0.0
    %184 = vmatprep.subr.mxu0 0.0
    %185 = vmatpush2.msra.mxu0 0.0
    %186 = vmatprep.mubr.f32.mxu0 0.0
    %187 = vmatmul.mubr.f32.gmra.mxu0 %v117
    %v188 = vpop.f32.mrf.mxu0
    %v189 = vadd.f32 0.0, %v188
    %v190 = vpop.f32.mrf.mxu0
    %191 = vdwg.mxu0
    %v192 = vmul.f32 %v189, 0.11111111
    %vm193 = vcmask 64512
    %194 = vst.msk [vmem:[#allocation2] sm:$0xff] %vm193, %v192
    %s195 = scalar_lea.vmem %s0, 24
    %v196 = vld [vmem:[%s195] sm:$0xff]
    %v197 = vld [vmem:[%s195 + $0x8] sm:$0xff]
    %v198 = vld [vmem:[%s195 + $0x10] sm:$0x3]
    %v200 = vsel %vm22, %v196, 0
    %v203 = vsel %vm22, %v197, 0
    %v206 = vsel %vm22, %v198, 0
    %208 = vmatprep.subr.mxu0 0.0
    %209 = vmatpush1.msra.mxu0 0.0
    %210 = vmatprep.subr.mxu0 0.0
    %211 = vmatpush1.msra.mxu0 0.0
    %212 = vmatprep.subr.mxu0 0.0
    %213 = vmatpush1.msra.mxu0 0.0
    %214 = vmatprep.subr.mxu0 0.0
    %215 = vmatpush1.msra.mxu0 0.0
    %216 = vmatprep.subr.mxu0 0.0
    %217 = vmatpush1.msra.mxu0 0.0
    %218 = vmatprep.subr.mxu0 0.0
    %219 = vmatpush1.msra.mxu0 0.0
    %220 = vmatprep.subr.mxu0 0.0
    %221 = vmatpush1.msra.mxu0 0.0
    %222 = vmatprep.subr.mxu0 0.0
    %223 = vmatpush1.msra.mxu0 0.0
    %224 = vmatprep.subr.mxu0 0.0
    %225 = vmatpush1.msra.mxu0 0.0
    %226 = vmatprep.subr.mxu0 0.0
    %227 = vmatpush1.msra.mxu0 0.0
    %228 = vmatprep.subr.mxu0 0.0
    %229 = vmatpush1.msra.mxu0 0.0
    %230 = vmatprep.subr.mxu0 0.0
    %231 = vmatpush1.msra.mxu0 0.0
    %232 = vmatprep.subr.mxu0 0.0
    %233 = vmatpush1.msra.mxu0 0.0
    %234 = vmatprep.subr.mxu0 0.0
    %235 = vmatpush1.msra.mxu0 %v34
    %236 = vmatprep.subr.mxu0 0.0
    %237 = vmatpush1.msra.mxu0 %v17
    %238 = vmatprep.subr.mxu0 0.0
    %239 = vmatpush1.msra.mxu0 %v16
    %240 = vmatprep.subr.mxu0 0.0
    %241 = vmatpush2.msra.mxu0 0.0
    %242 = vmatprep.subr.mxu0 0.0
    %243 = vmatpush2.msra.mxu0 0.0
    %244 = vmatprep.subr.mxu0 0.0
    %245 = vmatpush2.msra.mxu0 0.0
    %246 = vmatprep.subr.mxu0 0.0
    %247 = vmatpush2.msra.mxu0 0.0
    %248 = vmatprep.subr.mxu0 0.0
    %249 = vmatpush2.msra.mxu0 0.0
    %250 = vmatprep.subr.mxu0 0.0
    %251 = vmatpush2.msra.mxu0 0.0
    %252 = vmatprep.subr.mxu0 0.0
    %253 = vmatpush2.msra.mxu0 0.0
    %254 = vmatprep.subr.mxu0 0.0
    %255 = vmatpush2.msra.mxu0 0.0
    %256 = vmatprep.subr.mxu0 0.0
    %257 = vmatpush2.msra.mxu0 0.0
    %258 = vmatprep.subr.mxu0 0.0
    %259 = vmatpush2.msra.mxu0 0.0
    %260 = vmatprep.subr.mxu0 0.0
    %261 = vmatpush2.msra.mxu0 0.0
    %262 = vmatprep.subr.mxu0 0.0
    %263 = vmatpush2.msra.mxu0 0.0
    %264 = vmatprep.subr.mxu0 0.0
    %265 = vmatpush2.msra.mxu0 0.0
    %266 = vmatprep.subr.mxu0 0.0
    %267 = vmatpush2.msra.mxu0 0.0
    %268 = vmatprep.subr.mxu0 0.0
    %269 = vmatpush2.msra.mxu0 0.0
    %270 = vmatprep.subr.mxu0 0.0
    %271 = vmatpush2.msra.mxu0 0.0
    %272 = vmatprep.mubr.f32.mxu0 0.0
    %273 = vmatmul.mubr.f32.gmra.mxu0 %v200
    %v274 = vpop.f32.mrf.mxu0
    %v275 = vadd.f32 0.0, %v274
    %v276 = vpop.f32.mrf.mxu0
    %277 = vmatprep.mubr.f32.mxu0 0.0
    %278 = vmatmul.mubr.f32.gmra.mxu0 %v203
    %v279 = vpop.f32.mrf.mxu0
    %v280 = vadd.f32 0.0, %v279
    %v281 = vpop.f32.mrf.mxu0
    %282 = vmatprep.mubr.f32.mxu0 0.0
    %283 = vmatmul.mubr.f32.gmra.mxu0 %v206
    %v284 = vpop.f32.mrf.mxu0
    %v285 = vadd.f32 0.0, %v284
    %v286 = vpop.f32.mrf.mxu0
    %287 = vdwg.mxu0
    %v289 = vsel %vm32, %v285, 0
    %291 = vmatprep.subr.mxu0 0.0
    %292 = vmatpush1.msra.mxu0 0.0
    %293 = vmatprep.subr.mxu0 0.0
    %294 = vmatpush1.msra.mxu0 0.0
    %295 = vmatprep.subr.mxu0 0.0
    %296 = vmatpush1.msra.mxu0 0.0
    %297 = vmatprep.subr.mxu0 0.0
    %298 = vmatpush1.msra.mxu0 0.0
    %299 = vmatprep.subr.mxu0 0.0
    %300 = vmatpush1.msra.mxu0 0.0
    %301 = vmatprep.subr.mxu0 0.0
    %302 = vmatpush1.msra.mxu0 0.0
    %303 = vmatprep.subr.mxu0 0.0
    %304 = vmatpush1.msra.mxu0 0.0
    %305 = vmatprep.subr.mxu0 0.0
    %306 = vmatpush1.msra.mxu0 0.0
    %307 = vmatprep.subr.mxu0 0.0
    %308 = vmatpush1.msra.mxu0 0.0
    %309 = vmatprep.subr.mxu0 0.0
    %310 = vmatpush1.msra.mxu0 0.0
    %311 = vmatprep.subr.mxu0 0.0
    %312 = vmatpush1.msra.mxu0 0.0
    %313 = vmatprep.subr.mxu0 0.0
    %314 = vmatpush1.msra.mxu0 0.0
    %315 = vmatprep.subr.mxu0 0.0
    %316 = vmatpush1.msra.mxu0 0.0
    %317 = vmatprep.subr.mxu0 0.0
    %318 = vmatpush1.msra.mxu0 %v289
    %319 = vmatprep.subr.mxu0 0.0
    %320 = vmatpush1.msra.mxu0 %v280
    %321 = vmatprep.subr.mxu0 0.0
    %322 = vmatpush1.msra.mxu0 %v275
    %323 = vmatprep.subr.mxu0 0.0
    %324 = vmatpush2.msra.mxu0 0.0
    %325 = vmatprep.subr.mxu0 0.0
    %326 = vmatpush2.msra.mxu0 0.0
    %327 = vmatprep.subr.mxu0 0.0
    %328 = vmatpush2.msra.mxu0 0.0
    %329 = vmatprep.subr.mxu0 0.0
    %330 = vmatpush2.msra.mxu0 0.0
    %331 = vmatprep.subr.mxu0 0.0
    %332 = vmatpush2.msra.mxu0 0.0
    %333 = vmatprep.subr.mxu0 0.0
    %334 = vmatpush2.msra.mxu0 0.0
    %335 = vmatprep.subr.mxu0 0.0
    %336 = vmatpush2.msra.mxu0 0.0
    %337 = vmatprep.subr.mxu0 0.0
    %338 = vmatpush2.msra.mxu0 0.0
    %339 = vmatprep.subr.mxu0 0.0
    %340 = vmatpush2.msra.mxu0 0.0
    %341 = vmatprep.subr.mxu0 0.0
    %342 = vmatpush2.msra.mxu0 0.0
    %343 = vmatprep.subr.mxu0 0.0
    %344 = vmatpush2.msra.mxu0 0.0
    %345 = vmatprep.subr.mxu0 0.0
    %346 = vmatpush2.msra.mxu0 0.0
    %347 = vmatprep.subr.mxu0 0.0
    %348 = vmatpush2.msra.mxu0 0.0
    %349 = vmatprep.subr.mxu0 0.0
    %350 = vmatpush2.msra.mxu0 0.0
    %351 = vmatprep.subr.mxu0 0.0
    %352 = vmatpush2.msra.mxu0 0.0
    %353 = vmatprep.subr.mxu0 0.0
    %354 = vmatpush2.msra.mxu0 0.0
    %355 = vmatprep.mubr.f32.mxu0 0.0
    %356 = vmatmul.mubr.f32.gmra.mxu0 %v117
    %v357 = vpop.f32.mrf.mxu0
    %v358 = vadd.f32 0.0, %v357
    %v359 = vpop.f32.mrf.mxu0
    %360 = vdwg.mxu0
    %v361 = vmul.f32 %v358, 0.11111111
    %s362 = scalar_lea.vmem [#allocation2], 8
    %363 = vst.msk [vmem:[%s362] sm:$0xff] %vm193, %v361
    %s364 = scalar_lea.vmem %s0, 48
    %v365 = vld [vmem:[%s364] sm:$0xff]
    %v366 = vld [vmem:[%s364 + $0x8] sm:$0xff]
    %v367 = vld [vmem:[%s364 + $0x10] sm:$0x3]
    %v369 = vsel %vm22, %v365, 0
    %v372 = vsel %vm22, %v366, 0
    %v375 = vsel %vm22, %v367, 0
    %377 = vmatprep.subr.mxu0 0.0
    %378 = vmatpush1.msra.mxu0 0.0
    %379 = vmatprep.subr.mxu0 0.0
    %380 = vmatpush1.msra.mxu0 0.0
    %381 = vmatprep.subr.mxu0 0.0
    %382 = vmatpush1.msra.mxu0 0.0
    %383 = vmatprep.subr.mxu0 0.0
    %384 = vmatpush1.msra.mxu0 0.0
    %385 = vmatprep.subr.mxu0 0.0
    %386 = vmatpush1.msra.mxu0 0.0
    %387 = vmatprep.subr.mxu0 0.0
    %388 = vmatpush1.msra.mxu0 0.0
    %389 = vmatprep.subr.mxu0 0.0
    %390 = vmatpush1.msra.mxu0 0.0
    %391 = vmatprep.subr.mxu0 0.0
    %392 = vmatpush1.msra.mxu0 0.0
    %393 = vmatprep.subr.mxu0 0.0
    %394 = vmatpush1.msra.mxu0 0.0
    %395 = vmatprep.subr.mxu0 0.0
    %396 = vmatpush1.msra.mxu0 0.0
    %397 = vmatprep.subr.mxu0 0.0
    %398 = vmatpush1.msra.mxu0 0.0
    %399 = vmatprep.subr.mxu0 0.0
    %400 = vmatpush1.msra.mxu0 0.0
    %401 = vmatprep.subr.mxu0 0.0
    %402 = vmatpush1.msra.mxu0 0.0
    %403 = vmatprep.subr.mxu0 0.0
    %404 = vmatpush1.msra.mxu0 %v34
    %405 = vmatprep.subr.mxu0 0.0
    %406 = vmatpush1.msra.mxu0 %v17
    %407 = vmatprep.subr.mxu0 0.0
    %408 = vmatpush1.msra.mxu0 %v16
    %409 = vmatprep.subr.mxu0 0.0
    %410 = vmatpush2.msra.mxu0 0.0
    %411 = vmatprep.subr.mxu0 0.0
    %412 = vmatpush2.msra.mxu0 0.0
    %413 = vmatprep.subr.mxu0 0.0
    %414 = vmatpush2.msra.mxu0 0.0
    %415 = vmatprep.subr.mxu0 0.0
    %416 = vmatpush2.msra.mxu0 0.0
    %417 = vmatprep.subr.mxu0 0.0
    %418 = vmatpush2.msra.mxu0 0.0
    %419 = vmatprep.subr.mxu0 0.0
    %420 = vmatpush2.msra.mxu0 0.0
    %421 = vmatprep.subr.mxu0 0.0
    %422 = vmatpush2.msra.mxu0 0.0
    %423 = vmatprep.subr.mxu0 0.0
    %424 = vmatpush2.msra.mxu0 0.0
    %425 = vmatprep.subr.mxu0 0.0
    %426 = vmatpush2.msra.mxu0 0.0
    %427 = vmatprep.subr.mxu0 0.0
    %428 = vmatpush2.msra.mxu0 0.0
    %429 = vmatprep.subr.mxu0 0.0
    %430 = vmatpush2.msra.mxu0 0.0
    %431 = vmatprep.subr.mxu0 0.0
    %432 = vmatpush2.msra.mxu0 0.0
    %433 = vmatprep.subr.mxu0 0.0
    %434 = vmatpush2.msra.mxu0 0.0
    %435 = vmatprep.subr.mxu0 0.0
    %436 = vmatpush2.msra.mxu0 0.0
    %437 = vmatprep.subr.mxu0 0.0
    %438 = vmatpush2.msra.mxu0 0.0
    %439 = vmatprep.subr.mxu0 0.0
    %440 = vmatpush2.msra.mxu0 0.0
    %441 = vmatprep.mubr.f32.mxu0 0.0
    %442 = vmatmul.mubr.f32.gmra.mxu0 %v369
    %v443 = vpop.f32.mrf.mxu0
    %v444 = vadd.f32 0.0, %v443
    %v445 = vpop.f32.mrf.mxu0
    %446 = vmatprep.mubr.f32.mxu0 0.0
    %447 = vmatmul.mubr.f32.gmra.mxu0 %v372
    %v448 = vpop.f32.mrf.mxu0
    %v449 = vadd.f32 0.0, %v448
    %v450 = vpop.f32.mrf.mxu0
    %451 = vmatprep.mubr.f32.mxu0 0.0
    %452 = vmatmul.mubr.f32.gmra.mxu0 %v375
    %v453 = vpop.f32.mrf.mxu0
    %v454 = vadd.f32 0.0, %v453
    %v455 = vpop.f32.mrf.mxu0
    %456 = vdwg.mxu0
    %v458 = vsel %vm32, %v454, 0
    %460 = vmatprep.subr.mxu0 0.0
    %461 = vmatpush1.msra.mxu0 0.0
    %462 = vmatprep.subr.mxu0 0.0
    %463 = vmatpush1.msra.mxu0 0.0
    %464 = vmatprep.subr.mxu0 0.0
    %465 = vmatpush1.msra.mxu0 0.0
    %466 = vmatprep.subr.mxu0 0.0
    %467 = vmatpush1.msra.mxu0 0.0
    %468 = vmatprep.subr.mxu0 0.0
    %469 = vmatpush1.msra.mxu0 0.0
    %470 = vmatprep.subr.mxu0 0.0
    %471 = vmatpush1.msra.mxu0 0.0
    %472 = vmatprep.subr.mxu0 0.0
    %473 = vmatpush1.msra.mxu0 0.0
    %474 = vmatprep.subr.mxu0 0.0
    %475 = vmatpush1.msra.mxu0 0.0
    %476 = vmatprep.subr.mxu0 0.0
    %477 = vmatpush1.msra.mxu0 0.0
    %478 = vmatprep.subr.mxu0 0.0
    %479 = vmatpush1.msra.mxu0 0.0
    %480 = vmatprep.subr.mxu0 0.0
    %481 = vmatpush1.msra.mxu0 0.0
    %482 = vmatprep.subr.mxu0 0.0
    %483 = vmatpush1.msra.mxu0 0.0
    %484 = vmatprep.subr.mxu0 0.0
    %485 = vmatpush1.msra.mxu0 0.0
    %486 = vmatprep.subr.mxu0 0.0
    %487 = vmatpush1.msra.mxu0 %v458
    %488 = vmatprep.subr.mxu0 0.0
    %489 = vmatpush1.msra.mxu0 %v449
    %490 = vmatprep.subr.mxu0 0.0
    %491 = vmatpush1.msra.mxu0 %v444
    %492 = vmatprep.subr.mxu0 0.0
    %493 = vmatpush2.msra.mxu0 0.0
    %494 = vmatprep.subr.mxu0 0.0
    %495 = vmatpush2.msra.mxu0 0.0
    %496 = vmatprep.subr.mxu0 0.0
    %497 = vmatpush2.msra.mxu0 0.0
    %498 = vmatprep.subr.mxu0 0.0
    %499 = vmatpush2.msra.mxu0 0.0
    %500 = vmatprep.subr.mxu0 0.0
    %501 = vmatpush2.msra.mxu0 0.0
    %502 = vmatprep.subr.mxu0 0.0
    %503 = vmatpush2.msra.mxu0 0.0
    %504 = vmatprep.subr.mxu0 0.0
    %505 = vmatpush2.msra.mxu0 0.0
    %506 = vmatprep.subr.mxu0 0.0
    %507 = vmatpush2.msra.mxu0 0.0
    %508 = vmatprep.subr.mxu0 0.0
    %509 = vmatpush2.msra.mxu0 0.0
    %510 = vmatprep.subr.mxu0 0.0
    %511 = vmatpush2.msra.mxu0 0.0
    %512 = vmatprep.subr.mxu0 0.0
    %513 = vmatpush2.msra.mxu0 0.0
    %514 = vmatprep.subr.mxu0 0.0
    %515 = vmatpush2.msra.mxu0 0.0
    %516 = vmatprep.subr.mxu0 0.0
    %517 = vmatpush2.msra.mxu0 0.0
    %518 = vmatprep.subr.mxu0 0.0
    %519 = vmatpush2.msra.mxu0 0.0
    %520 = vmatprep.subr.mxu0 0.0
    %521 = vmatpush2.msra.mxu0 0.0
    %522 = vmatprep.subr.mxu0 0.0
    %523 = vmatpush2.msra.mxu0 0.0
    %524 = vmatprep.mubr.f32.mxu0 0.0
    %525 = vmatmul.mubr.f32.gmra.mxu0 %v117
    %v526 = vpop.f32.mrf.mxu0
    %v527 = vadd.f32 0.0, %v526
    %v528 = vpop.f32.mrf.mxu0
    %529 = vdwg.mxu0
    %v530 = vmul.f32 %v527, 0.11111111
    %s531 = scalar_lea.vmem [#allocation2], 16
    %532 = vst.msk [vmem:[%s531] sm:$0xff] %vm193, %v530
    %s533 = scalar_lea.vmem %s0, 72
    %v534 = vld [vmem:[%s533] sm:$0xff]
    %v535 = vld [vmem:[%s533 + $0x8] sm:$0xff]
    %v536 = vld [vmem:[%s533 + $0x10] sm:$0x3]
    %v538 = vsel %vm22, %v534, 0
    %v541 = vsel %vm22, %v535, 0
    %v544 = vsel %vm22, %v536, 0
    %546 = vmatprep.subr.mxu0 0.0
    %547 = vmatpush1.msra.mxu0 0.0
    %548 = vmatprep.subr.mxu0 0.0
    %549 = vmatpush1.msra.mxu0 0.0
    %550 = vmatprep.subr.mxu0 0.0
    %551 = vmatpush1.msra.mxu0 0.0
    %552 = vmatprep.subr.mxu0 0.0
    %553 = vmatpush1.msra.mxu0 0.0
    %554 = vmatprep.subr.mxu0 0.0
    %555 = vmatpush1.msra.mxu0 0.0
    %556 = vmatprep.subr.mxu0 0.0
    %557 = vmatpush1.msra.mxu0 0.0
    %558 = vmatprep.subr.mxu0 0.0
    %559 = vmatpush1.msra.mxu0 0.0
    %560 = vmatprep.subr.mxu0 0.0
    %561 = vmatpush1.msra.mxu0 0.0
    %562 = vmatprep.subr.mxu0 0.0
    %563 = vmatpush1.msra.mxu0 0.0
    %564 = vmatprep.subr.mxu0 0.0
    %565 = vmatpush1.msra.mxu0 0.0
    %566 = vmatprep.subr.mxu0 0.0
    %567 = vmatpush1.msra.mxu0 0.0
    %568 = vmatprep.subr.mxu0 0.0
    %569 = vmatpush1.msra.mxu0 0.0
    %570 = vmatprep.subr.mxu0 0.0
    %571 = vmatpush1.msra.mxu0 0.0
    %572 = vmatprep.subr.mxu0 0.0
    %573 = vmatpush1.msra.mxu0 %v34
    %574 = vmatprep.subr.mxu0 0.0
    %575 = vmatpush1.msra.mxu0 %v17
    %576 = vmatprep.subr.mxu0 0.0
    %577 = vmatpush1.msra.mxu0 %v16
    %578 = vmatprep.subr.mxu0 0.0
    %579 = vmatpush2.msra.mxu0 0.0
    %580 = vmatprep.subr.mxu0 0.0
    %581 = vmatpush2.msra.mxu0 0.0
    %582 = vmatprep.subr.mxu0 0.0
    %583 = vmatpush2.msra.mxu0 0.0
    %584 = vmatprep.subr.mxu0 0.0
    %585 = vmatpush2.msra.mxu0 0.0
    %586 = vmatprep.subr.mxu0 0.0
    %587 = vmatpush2.msra.mxu0 0.0
    %588 = vmatprep.subr.mxu0 0.0
    %589 = vmatpush2.msra.mxu0 0.0
    %590 = vmatprep.subr.mxu0 0.0
    %591 = vmatpush2.msra.mxu0 0.0
    %592 = vmatprep.subr.mxu0 0.0
    %593 = vmatpush2.msra.mxu0 0.0
    %594 = vmatprep.subr.mxu0 0.0
    %595 = vmatpush2.msra.mxu0 0.0
    %596 = vmatprep.subr.mxu0 0.0
    %597 = vmatpush2.msra.mxu0 0.0
    %598 = vmatprep.subr.mxu0 0.0
    %599 = vmatpush2.msra.mxu0 0.0
    %600 = vmatprep.subr.mxu0 0.0
    %601 = vmatpush2.msra.mxu0 0.0
    %602 = vmatprep.subr.mxu0 0.0
    %603 = vmatpush2.msra.mxu0 0.0
    %604 = vmatprep.subr.mxu0 0.0
    %605 = vmatpush2.msra.mxu0 0.0
    %606 = vmatprep.subr.mxu0 0.0
    %607 = vmatpush2.msra.mxu0 0.0
    %608 = vmatprep.subr.mxu0 0.0
    %609 = vmatpush2.msra.mxu0 0.0
    %610 = vmatprep.mubr.f32.mxu0 0.0
    %611 = vmatmul.mubr.f32.gmra.mxu0 %v538
    %v612 = vpop.f32.mrf.mxu0
    %v613 = vadd.f32 0.0, %v612
    %v614 = vpop.f32.mrf.mxu0
    %615 = vmatprep.mubr.f32.mxu0 0.0
    %616 = vmatmul.mubr.f32.gmra.mxu0 %v541
    %v617 = vpop.f32.mrf.mxu0
    %v618 = vadd.f32 0.0, %v617
    %v619 = vpop.f32.mrf.mxu0
    %620 = vmatprep.mubr.f32.mxu0 0.0
    %621 = vmatmul.mubr.f32.gmra.mxu0 %v544
    %v622 = vpop.f32.mrf.mxu0
    %v623 = vadd.f32 0.0, %v622
    %v624 = vpop.f32.mrf.mxu0
    %625 = vdwg.mxu0
    %v627 = vsel %vm32, %v623, 0
    %629 = vmatprep.subr.mxu0 0.0
    %630 = vmatpush1.msra.mxu0 0.0
    %631 = vmatprep.subr.mxu0 0.0
    %632 = vmatpush1.msra.mxu0 0.0
    %633 = vmatprep.subr.mxu0 0.0
    %634 = vmatpush1.msra.mxu0 0.0
    %635 = vmatprep.subr.mxu0 0.0
    %636 = vmatpush1.msra.mxu0 0.0
    %637 = vmatprep.subr.mxu0 0.0
    %638 = vmatpush1.msra.mxu0 0.0
    %639 = vmatprep.subr.mxu0 0.0
    %640 = vmatpush1.msra.mxu0 0.0
    %641 = vmatprep.subr.mxu0 0.0
    %642 = vmatpush1.msra.mxu0 0.0
    %643 = vmatprep.subr.mxu0 0.0
    %644 = vmatpush1.msra.mxu0 0.0
    %645 = vmatprep.subr.mxu0 0.0
    %646 = vmatpush1.msra.mxu0 0.0
    %647 = vmatprep.subr.mxu0 0.0
    %648 = vmatpush1.msra.mxu0 0.0
    %649 = vmatprep.subr.mxu0 0.0
    %650 = vmatpush1.msra.mxu0 0.0
    %651 = vmatprep.subr.mxu0 0.0
    %652 = vmatpush1.msra.mxu0 0.0
    %653 = vmatprep.subr.mxu0 0.0
    %654 = vmatpush1.msra.mxu0 0.0
    %655 = vmatprep.subr.mxu0 0.0
    %656 = vmatpush1.msra.mxu0 %v627
    %657 = vmatprep.subr.mxu0 0.0
    %658 = vmatpush1.msra.mxu0 %v618
    %659 = vmatprep.subr.mxu0 0.0
    %660 = vmatpush1.msra.mxu0 %v613
    %661 = vmatprep.subr.mxu0 0.0
    %662 = vmatpush2.msra.mxu0 0.0
    %663 = vmatprep.subr.mxu0 0.0
    %664 = vmatpush2.msra.mxu0 0.0
    %665 = vmatprep.subr.mxu0 0.0
    %666 = vmatpush2.msra.mxu0 0.0
    %667 = vmatprep.subr.mxu0 0.0
    %668 = vmatpush2.msra.mxu0 0.0
    %669 = vmatprep.subr.mxu0 0.0
    %670 = vmatpush2.msra.mxu0 0.0
    %671 = vmatprep.subr.mxu0 0.0
    %672 = vmatpush2.msra.mxu0 0.0
    %673 = vmatprep.subr.mxu0 0.0
    %674 = vmatpush2.msra.mxu0 0.0
    %675 = vmatprep.subr.mxu0 0.0
    %676 = vmatpush2.msra.mxu0 0.0
    %677 = vmatprep.subr.mxu0 0.0
    %678 = vmatpush2.msra.mxu0 0.0
    %679 = vmatprep.subr.mxu0 0.0
    %680 = vmatpush2.msra.mxu0 0.0
    %681 = vmatprep.subr.mxu0 0.0
    %682 = vmatpush2.msra.mxu0 0.0
    %683 = vmatprep.subr.mxu0 0.0
    %684 = vmatpush2.msra.mxu0 0.0
    %685 = vmatprep.subr.mxu0 0.0
    %686 = vmatpush2.msra.mxu0 0.0
    %687 = vmatprep.subr.mxu0 0.0
    %688 = vmatpush2.msra.mxu0 0.0
    %689 = vmatprep.subr.mxu0 0.0
    %690 = vmatpush2.msra.mxu0 0.0
    %691 = vmatprep.subr.mxu0 0.0
    %692 = vmatpush2.msra.mxu0 0.0
    %693 = vmatprep.mubr.f32.mxu0 0.0
    %694 = vmatmul.mubr.f32.gmra.mxu0 %v117
    %v695 = vpop.f32.mrf.mxu0
    %v696 = vadd.f32 0.0, %v695
    %v697 = vpop.f32.mrf.mxu0
    %698 = vdwg.mxu0
    %v699 = vmul.f32 %v696, 0.11111111
    %s700 = scalar_lea.vmem [#allocation2], 24
    %701 = vst.msk [vmem:[%s700] sm:$0xff] %vm193, %v699
    %s702 = scalar_lea.vmem %s0, 96
    %v703 = vld [vmem:[%s702] sm:$0xff]
    %v704 = vld [vmem:[%s702 + $0x8] sm:$0xff]
    %v705 = vld [vmem:[%s702 + $0x10] sm:$0x3]
    %v707 = vsel %vm22, %v703, 0
    %v710 = vsel %vm22, %v704, 0
    %v713 = vsel %vm22, %v705, 0
    %715 = vmatprep.subr.mxu0 0.0
    %716 = vmatpush1.msra.mxu0 0.0
    %717 = vmatprep.subr.mxu0 0.0
    %718 = vmatpush1.msra.mxu0 0.0
    %719 = vmatprep.subr.mxu0 0.0
    %720 = vmatpush1.msra.mxu0 0.0
    %721 = vmatprep.subr.mxu0 0.0
    %722 = vmatpush1.msra.mxu0 0.0
    %723 = vmatprep.subr.mxu0 0.0
    %724 = vmatpush1.msra.mxu0 0.0
    %725 = vmatprep.subr.mxu0 0.0
    %726 = vmatpush1.msra.mxu0 0.0
    %727 = vmatprep.subr.mxu0 0.0
    %728 = vmatpush1.msra.mxu0 0.0
    %729 = vmatprep.subr.mxu0 0.0
    %730 = vmatpush1.msra.mxu0 0.0
    %731 = vmatprep.subr.mxu0 0.0
    %732 = vmatpush1.msra.mxu0 0.0
    %733 = vmatprep.subr.mxu0 0.0
    %734 = vmatpush1.msra.mxu0 0.0
    %735 = vmatprep.subr.mxu0 0.0
    %736 = vmatpush1.msra.mxu0 0.0
    %737 = vmatprep.subr.mxu0 0.0
    %738 = vmatpush1.msra.mxu0 0.0
    %739 = vmatprep.subr.mxu0 0.0
    %740 = vmatpush1.msra.mxu0 0.0
    %741 = vmatprep.subr.mxu0 0.0
    %742 = vmatpush1.msra.mxu0 %v34
    %743 = vmatprep.subr.mxu0 0.0
    %744 = vmatpush1.msra.mxu0 %v17
    %745 = vmatprep.subr.mxu0 0.0
    %746 = vmatpush1.msra.mxu0 %v16
    %747 = vmatprep.subr.mxu0 0.0
    %748 = vmatpush2.msra.mxu0 0.0
    %749 = vmatprep.subr.mxu0 0.0
    %750 = vmatpush2.msra.mxu0 0.0
    %751 = vmatprep.subr.mxu0 0.0
    %752 = vmatpush2.msra.mxu0 0.0
    %753 = vmatprep.subr.mxu0 0.0
    %754 = vmatpush2.msra.mxu0 0.0
    %755 = vmatprep.subr.mxu0 0.0
    %756 = vmatpush2.msra.mxu0 0.0
    %757 = vmatprep.subr.mxu0 0.0
    %758 = vmatpush2.msra.mxu0 0.0
    %759 = vmatprep.subr.mxu0 0.0
    %760 = vmatpush2.msra.mxu0 0.0
    %761 = vmatprep.subr.mxu0 0.0
    %762 = vmatpush2.msra.mxu0 0.0
    %763 = vmatprep.subr.mxu0 0.0
    %764 = vmatpush2.msra.mxu0 0.0
    %765 = vmatprep.subr.mxu0 0.0
    %766 = vmatpush2.msra.mxu0 0.0
    %767 = vmatprep.subr.mxu0 0.0
    %768 = vmatpush2.msra.mxu0 0.0
    %769 = vmatprep.subr.mxu0 0.0
    %770 = vmatpush2.msra.mxu0 0.0
    %771 = vmatprep.subr.mxu0 0.0
    %772 = vmatpush2.msra.mxu0 0.0
    %773 = vmatprep.subr.mxu0 0.0
    %774 = vmatpush2.msra.mxu0 0.0
    %775 = vmatprep.subr.mxu0 0.0
    %776 = vmatpush2.msra.mxu0 0.0
    %777 = vmatprep.subr.mxu0 0.0
    %778 = vmatpush2.msra.mxu0 0.0
    %779 = vmatprep.mubr.f32.mxu0 0.0
    %780 = vmatmul.mubr.f32.gmra.mxu0 %v707
    %v781 = vpop.f32.mrf.mxu0
    %v782 = vadd.f32 0.0, %v781
    %v783 = vpop.f32.mrf.mxu0
    %784 = vmatprep.mubr.f32.mxu0 0.0
    %785 = vmatmul.mubr.f32.gmra.mxu0 %v710
    %v786 = vpop.f32.mrf.mxu0
    %v787 = vadd.f32 0.0, %v786
    %v788 = vpop.f32.mrf.mxu0
    %789 = vmatprep.mubr.f32.mxu0 0.0
    %790 = vmatmul.mubr.f32.gmra.mxu0 %v713
    %v791 = vpop.f32.mrf.mxu0
    %v792 = vadd.f32 0.0, %v791
    %v793 = vpop.f32.mrf.mxu0
    %794 = vdwg.mxu0
    %v796 = vsel %vm32, %v792, 0
    %798 = vmatprep.subr.mxu0 0.0
    %799 = vmatpush1.msra.mxu0 0.0
    %800 = vmatprep.subr.mxu0 0.0
    %801 = vmatpush1.msra.mxu0 0.0
    %802 = vmatprep.subr.mxu0 0.0
    %803 = vmatpush1.msra.mxu0 0.0
    %804 = vmatprep.subr.mxu0 0.0
    %805 = vmatpush1.msra.mxu0 0.0
    %806 = vmatprep.subr.mxu0 0.0
    %807 = vmatpush1.msra.mxu0 0.0
    %808 = vmatprep.subr.mxu0 0.0
    %809 = vmatpush1.msra.mxu0 0.0
    %810 = vmatprep.subr.mxu0 0.0
    %811 = vmatpush1.msra.mxu0 0.0
    %812 = vmatprep.subr.mxu0 0.0
    %813 = vmatpush1.msra.mxu0 0.0
    %814 = vmatprep.subr.mxu0 0.0
    %815 = vmatpush1.msra.mxu0 0.0
    %816 = vmatprep.subr.mxu0 0.0
    %817 = vmatpush1.msra.mxu0 0.0
    %818 = vmatprep.subr.mxu0 0.0
    %819 = vmatpush1.msra.mxu0 0.0
    %820 = vmatprep.subr.mxu0 0.0
    %821 = vmatpush1.msra.mxu0 0.0
    %822 = vmatprep.subr.mxu0 0.0
    %823 = vmatpush1.msra.mxu0 0.0
    %824 = vmatprep.subr.mxu0 0.0
    %825 = vmatpush1.msra.mxu0 %v796
    %826 = vmatprep.subr.mxu0 0.0
    %827 = vmatpush1.msra.mxu0 %v787
    %828 = vmatprep.subr.mxu0 0.0
    %829 = vmatpush1.msra.mxu0 %v782
    %830 = vmatprep.subr.mxu0 0.0
    %831 = vmatpush2.msra.mxu0 0.0
    %832 = vmatprep.subr.mxu0 0.0
    %833 = vmatpush2.msra.mxu0 0.0
    %834 = vmatprep.subr.mxu0 0.0
    %835 = vmatpush2.msra.mxu0 0.0
    %836 = vmatprep.subr.mxu0 0.0
    %837 = vmatpush2.msra.mxu0 0.0
    %838 = vmatprep.subr.mxu0 0.0
    %839 = vmatpush2.msra.mxu0 0.0
    %840 = vmatprep.subr.mxu0 0.0
    %841 = vmatpush2.msra.mxu0 0.0
    %842 = vmatprep.subr.mxu0 0.0
    %843 = vmatpush2.msra.mxu0 0.0
    %844 = vmatprep.subr.mxu0 0.0
    %845 = vmatpush2.msra.mxu0 0.0
    %846 = vmatprep.subr.mxu0 0.0
    %847 = vmatpush2.msra.mxu0 0.0
    %848 = vmatprep.subr.mxu0 0.0
    %849 = vmatpush2.msra.mxu0 0.0
    %850 = vmatprep.subr.mxu0 0.0
    %851 = vmatpush2.msra.mxu0 0.0
    %852 = vmatprep.subr.mxu0 0.0
    %853 = vmatpush2.msra.mxu0 0.0
    %854 = vmatprep.subr.mxu0 0.0
    %855 = vmatpush2.msra.mxu0 0.0
    %856 = vmatprep.subr.mxu0 0.0
    %857 = vmatpush2.msra.mxu0 0.0
    %858 = vmatprep.subr.mxu0 0.0
    %859 = vmatpush2.msra.mxu0 0.0
    %860 = vmatprep.subr.mxu0 0.0
    %861 = vmatpush2.msra.mxu0 0.0
    %862 = vmatprep.mubr.f32.mxu0 0.0
    %863 = vmatmul.mubr.f32.gmra.mxu0 %v117
    %v864 = vpop.f32.mrf.mxu0
    %v865 = vadd.f32 0.0, %v864
    %v866 = vpop.f32.mrf.mxu0
    %867 = vdwg.mxu0
    %v868 = vmul.f32 %v865, 0.11111111
    %s869 = scalar_lea.vmem [#allocation2], 32
    %870 = vst.msk [vmem:[%s869] sm:$0xff] %vm193, %v868
    %s871 = scalar_lea.vmem %s0, 120
    %v872 = vld [vmem:[%s871] sm:$0xff]
    %v873 = vld [vmem:[%s871 + $0x8] sm:$0xff]
    %v874 = vld [vmem:[%s871 + $0x10] sm:$0x3]
    %v876 = vsel %vm22, %v872, 0
    %v879 = vsel %vm22, %v873, 0
    %v882 = vsel %vm22, %v874, 0
    %884 = vmatprep.subr.mxu0 0.0
    %885 = vmatpush1.msra.mxu0 0.0
    %886 = vmatprep.subr.mxu0 0.0
    %887 = vmatpush1.msra.mxu0 0.0
    %888 = vmatprep.subr.mxu0 0.0
    %889 = vmatpush1.msra.mxu0 0.0
    %890 = vmatprep.subr.mxu0 0.0
    %891 = vmatpush1.msra.mxu0 0.0
    %892 = vmatprep.subr.mxu0 0.0
    %893 = vmatpush1.msra.mxu0 0.0
    %894 = vmatprep.subr.mxu0 0.0
    %895 = vmatpush1.msra.mxu0 0.0
    %896 = vmatprep.subr.mxu0 0.0
    %897 = vmatpush1.msra.mxu0 0.0
    %898 = vmatprep.subr.mxu0 0.0
    %899 = vmatpush1.msra.mxu0 0.0
    %900 = vmatprep.subr.mxu0 0.0
    %901 = vmatpush1.msra.mxu0 0.0
    %902 = vmatprep.subr.mxu0 0.0
    %903 = vmatpush1.msra.mxu0 0.0
    %904 = vmatprep.subr.mxu0 0.0
    %905 = vmatpush1.msra.mxu0 0.0
    %906 = vmatprep.subr.mxu0 0.0
    %907 = vmatpush1.msra.mxu0 0.0
    %908 = vmatprep.subr.mxu0 0.0
    %909 = vmatpush1.msra.mxu0 0.0
    %910 = vmatprep.subr.mxu0 0.0
    %911 = vmatpush1.msra.mxu0 %v34
    %912 = vmatprep.subr.mxu0 0.0
    %913 = vmatpush1.msra.mxu0 %v17
    %914 = vmatprep.subr.mxu0 0.0
    %915 = vmatpush1.msra.mxu0 %v16
    %916 = vmatprep.subr.mxu0 0.0
    %917 = vmatpush2.msra.mxu0 0.0
    %918 = vmatprep.subr.mxu0 0.0
    %919 = vmatpush2.msra.mxu0 0.0
    %920 = vmatprep.subr.mxu0 0.0
    %921 = vmatpush2.msra.mxu0 0.0
    %922 = vmatprep.subr.mxu0 0.0
    %923 = vmatpush2.msra.mxu0 0.0
    %924 = vmatprep.subr.mxu0 0.0
    %925 = vmatpush2.msra.mxu0 0.0
    %926 = vmatprep.subr.mxu0 0.0
    %927 = vmatpush2.msra.mxu0 0.0
    %928 = vmatprep.subr.mxu0 0.0
    %929 = vmatpush2.msra.mxu0 0.0
    %930 = vmatprep.subr.mxu0 0.0
    %931 = vmatpush2.msra.mxu0 0.0
    %932 = vmatprep.subr.mxu0 0.0
    %933 = vmatpush2.msra.mxu0 0.0
    %934 = vmatprep.subr.mxu0 0.0
    %935 = vmatpush2.msra.mxu0 0.0
    %936 = vmatprep.subr.mxu0 0.0
    %937 = vmatpush2.msra.mxu0 0.0
    %938 = vmatprep.subr.mxu0 0.0
    %939 = vmatpush2.msra.mxu0 0.0
    %940 = vmatprep.subr.mxu0 0.0
    %941 = vmatpush2.msra.mxu0 0.0
    %942 = vmatprep.subr.mxu0 0.0
    %943 = vmatpush2.msra.mxu0 0.0
    %944 = vmatprep.subr.mxu0 0.0
    %945 = vmatpush2.msra.mxu0 0.0
    %946 = vmatprep.subr.mxu0 0.0
    %947 = vmatpush2.msra.mxu0 0.0
    %948 = vmatprep.mubr.f32.mxu0 0.0
    %949 = vmatmul.mubr.f32.gmra.mxu0 %v876
    %v950 = vpop.f32.mrf.mxu0
    %v951 = vadd.f32 0.0, %v950
    %v952 = vpop.f32.mrf.mxu0
    %953 = vmatprep.mubr.f32.mxu0 0.0
    %954 = vmatmul.mubr.f32.gmra.mxu0 %v879
    %v955 = vpop.f32.mrf.mxu0
    %v956 = vadd.f32 0.0, %v955
    %v957 = vpop.f32.mrf.mxu0
    %958 = vmatprep.mubr.f32.mxu0 0.0
    %959 = vmatmul.mubr.f32.gmra.mxu0 %v882
    %v960 = vpop.f32.mrf.mxu0
    %v961 = vadd.f32 0.0, %v960
    %v962 = vpop.f32.mrf.mxu0
    %963 = vdwg.mxu0
    %v965 = vsel %vm32, %v961, 0
    %967 = vmatprep.subr.mxu0 0.0
    %968 = vmatpush1.msra.mxu0 0.0
    %969 = vmatprep.subr.mxu0 0.0
    %970 = vmatpush1.msra.mxu0 0.0
    %971 = vmatprep.subr.mxu0 0.0
    %972 = vmatpush1.msra.mxu0 0.0
    %973 = vmatprep.subr.mxu0 0.0
    %974 = vmatpush1.msra.mxu0 0.0
    %975 = vmatprep.subr.mxu0 0.0
    %976 = vmatpush1.msra.mxu0 0.0
    %977 = vmatprep.subr.mxu0 0.0
    %978 = vmatpush1.msra.mxu0 0.0
    %979 = vmatprep.subr.mxu0 0.0
    %980 = vmatpush1.msra.mxu0 0.0
    %981 = vmatprep.subr.mxu0 0.0
    %982 = vmatpush1.msra.mxu0 0.0
    %983 = vmatprep.subr.mxu0 0.0
    %984 = vmatpush1.msra.mxu0 0.0
    %985 = vmatprep.subr.mxu0 0.0
    %986 = vmatpush1.msra.mxu0 0.0
    %987 = vmatprep.subr.mxu0 0.0
    %988 = vmatpush1.msra.mxu0 0.0
    %989 = vmatprep.subr.mxu0 0.0
    %990 = vmatpush1.msra.mxu0 0.0
    %991 = vmatprep.subr.mxu0 0.0
    %992 = vmatpush1.msra.mxu0 0.0
    %993 = vmatprep.subr.mxu0 0.0
    %994 = vmatpush1.msra.mxu0 %v965
    %995 = vmatprep.subr.mxu0 0.0
    %996 = vmatpush1.msra.mxu0 %v956
    %997 = vmatprep.subr.mxu0 0.0
    %998 = vmatpush1.msra.mxu0 %v951
    %999 = vmatprep.subr.mxu0 0.0
    %1000 = vmatpush2.msra.mxu0 0.0
    %1001 = vmatprep.subr.mxu0 0.0
    %1002 = vmatpush2.msra.mxu0 0.0
    %1003 = vmatprep.subr.mxu0 0.0
    %1004 = vmatpush2.msra.mxu0 0.0
    %1005 = vmatprep.subr.mxu0 0.0
    %1006 = vmatpush2.msra.mxu0 0.0
    %1007 = vmatprep.subr.mxu0 0.0
    %1008 = vmatpush2.msra.mxu0 0.0
    %1009 = vmatprep.subr.mxu0 0.0
    %1010 = vmatpush2.msra.mxu0 0.0
    %1011 = vmatprep.subr.mxu0 0.0
    %1012 = vmatpush2.msra.mxu0 0.0
    %1013 = vmatprep.subr.mxu0 0.0
    %1014 = vmatpush2.msra.mxu0 0.0
    %1015 = vmatprep.subr.mxu0 0.0
    %1016 = vmatpush2.msra.mxu0 0.0
    %1017 = vmatprep.subr.mxu0 0.0
    %1018 = vmatpush2.msra.mxu0 0.0
    %1019 = vmatprep.subr.mxu0 0.0
    %1020 = vmatpush2.msra.mxu0 0.0
    %1021 = vmatprep.subr.mxu0 0.0
    %1022 = vmatpush2.msra.mxu0 0.0
    %1023 = vmatprep.subr.mxu0 0.0
    %1024 = vmatpush2.msra.mxu0 0.0
    %1025 = vmatprep.subr.mxu0 0.0
    %1026 = vmatpush2.msra.mxu0 0.0
    %1027 = vmatprep.subr.mxu0 0.0
    %1028 = vmatpush2.msra.mxu0 0.0
    %1029 = vmatprep.subr.mxu0 0.0
    %1030 = vmatpush2.msra.mxu0 0.0
    %1031 = vmatprep.mubr.f32.mxu0 0.0
    %1032 = vmatmul.mubr.f32.gmra.mxu0 %v117
    %v1033 = vpop.f32.mrf.mxu0
    %v1034 = vadd.f32 0.0, %v1033
    %v1035 = vpop.f32.mrf.mxu0
    %1036 = vdwg.mxu0
    %v1037 = vmul.f32 %v1034, 0.11111111
    %s1038 = scalar_lea.vmem [#allocation2], 40
    %1039 = vst.msk [vmem:[%s1038] sm:$0xff] %vm193, %v1037
    %s1040 = scalar_lea.vmem %s0, 144
    %v1041 = vld [vmem:[%s1040] sm:$0xff]
    %v1042 = vld [vmem:[%s1040 + $0x8] sm:$0xff]
    %v1043 = vld [vmem:[%s1040 + $0x10] sm:$0x3]
    %v1045 = vsel %vm22, %v1041, 0
    %v1048 = vsel %vm22, %v1042, 0
    %v1051 = vsel %vm22, %v1043, 0
    %1053 = vmatprep.subr.mxu0 0.0
    %1054 = vmatpush1.msra.mxu0 0.0
    %1055 = vmatprep.subr.mxu0 0.0
    %1056 = vmatpush1.msra.mxu0 0.0
    %1057 = vmatprep.subr.mxu0 0.0
    %1058 = vmatpush1.msra.mxu0 0.0
    %1059 = vmatprep.subr.mxu0 0.0
    %1060 = vmatpush1.msra.mxu0 0.0
    %1061 = vmatprep.subr.mxu0 0.0
    %1062 = vmatpush1.msra.mxu0 0.0
    %1063 = vmatprep.subr.mxu0 0.0
    %1064 = vmatpush1.msra.mxu0 0.0
    %1065 = vmatprep.subr.mxu0 0.0
    %1066 = vmatpush1.msra.mxu0 0.0
    %1067 = vmatprep.subr.mxu0 0.0
    %1068 = vmatpush1.msra.mxu0 0.0
    %1069 = vmatprep.subr.mxu0 0.0
    %1070 = vmatpush1.msra.mxu0 0.0
    %1071 = vmatprep.subr.mxu0 0.0
    %1072 = vmatpush1.msra.mxu0 0.0
    %1073 = vmatprep.subr.mxu0 0.0
    %1074 = vmatpush1.msra.mxu0 0.0
    %1075 = vmatprep.subr.mxu0 0.0
    %1076 = vmatpush1.msra.mxu0 0.0
    %1077 = vmatprep.subr.mxu0 0.0
    %1078 = vmatpush1.msra.mxu0 0.0
    %1079 = vmatprep.subr.mxu0 0.0
    %1080 = vmatpush1.msra.mxu0 %v34
    %1081 = vmatprep.subr.mxu0 0.0
    %1082 = vmatpush1.msra.mxu0 %v17
    %1083 = vmatprep.subr.mxu0 0.0
    %1084 = vmatpush1.msra.mxu0 %v16
    %1085 = vmatprep.subr.mxu0 0.0
    %1086 = vmatpush2.msra.mxu0 0.0
    %1087 = vmatprep.subr.mxu0 0.0
    %1088 = vmatpush2.msra.mxu0 0.0
    %1089 = vmatprep.subr.mxu0 0.0
    %1090 = vmatpush2.msra.mxu0 0.0
    %1091 = vmatprep.subr.mxu0 0.0
    %1092 = vmatpush2.msra.mxu0 0.0
    %1093 = vmatprep.subr.mxu0 0.0
    %1094 = vmatpush2.msra.mxu0 0.0
    %1095 = vmatprep.subr.mxu0 0.0
    %1096 = vmatpush2.msra.mxu0 0.0
    %1097 = vmatprep.subr.mxu0 0.0
    %1098 = vmatpush2.msra.mxu0 0.0
    %1099 = vmatprep.subr.mxu0 0.0
    %1100 = vmatpush2.msra.mxu0 0.0
    %1101 = vmatprep.subr.mxu0 0.0
    %1102 = vmatpush2.msra.mxu0 0.0
    %1103 = vmatprep.subr.mxu0 0.0
    %1104 = vmatpush2.msra.mxu0 0.0
    %1105 = vmatprep.subr.mxu0 0.0
    %1106 = vmatpush2.msra.mxu0 0.0
    %1107 = vmatprep.subr.mxu0 0.0
    %1108 = vmatpush2.msra.mxu0 0.0
    %1109 = vmatprep.subr.mxu0 0.0
    %1110 = vmatpush2.msra.mxu0 0.0
    %1111 = vmatprep.subr.mxu0 0.0
    %1112 = vmatpush2.msra.mxu0 0.0
    %1113 = vmatprep.subr.mxu0 0.0
    %1114 = vmatpush2.msra.mxu0 0.0
    %1115 = vmatprep.subr.mxu0 0.0
    %1116 = vmatpush2.msra.mxu0 0.0
    %1117 = vmatprep.mubr.f32.mxu0 0.0
    %1118 = vmatmul.mubr.f32.gmra.mxu0 %v1045
    %v1119 = vpop.f32.mrf.mxu0
    %v1120 = vadd.f32 0.0, %v1119
    %v1121 = vpop.f32.mrf.mxu0
    %1122 = vmatprep.mubr.f32.mxu0 0.0
    %1123 = vmatmul.mubr.f32.gmra.mxu0 %v1048
    %v1124 = vpop.f32.mrf.mxu0
    %v1125 = vadd.f32 0.0, %v1124
    %v1126 = vpop.f32.mrf.mxu0
    %1127 = vmatprep.mubr.f32.mxu0 0.0
    %1128 = vmatmul.mubr.f32.gmra.mxu0 %v1051
    %v1129 = vpop.f32.mrf.mxu0
    %v1130 = vadd.f32 0.0, %v1129
    %v1131 = vpop.f32.mrf.mxu0
    %1132 = vdwg.mxu0
    %v1134 = vsel %vm32, %v1130, 0
    %1136 = vmatprep.subr.mxu0 0.0
    %1137 = vmatpush1.msra.mxu0 0.0
    %1138 = vmatprep.subr.mxu0 0.0
    %1139 = vmatpush1.msra.mxu0 0.0
    %1140 = vmatprep.subr.mxu0 0.0
    %1141 = vmatpush1.msra.mxu0 0.0
    %1142 = vmatprep.subr.mxu0 0.0
    %1143 = vmatpush1.msra.mxu0 0.0
    %1144 = vmatprep.subr.mxu0 0.0
    %1145 = vmatpush1.msra.mxu0 0.0
    %1146 = vmatprep.subr.mxu0 0.0
    %1147 = vmatpush1.msra.mxu0 0.0
    %1148 = vmatprep.subr.mxu0 0.0
    %1149 = vmatpush1.msra.mxu0 0.0
    %1150 = vmatprep.subr.mxu0 0.0
    %1151 = vmatpush1.msra.mxu0 0.0
    %1152 = vmatprep.subr.mxu0 0.0
    %1153 = vmatpush1.msra.mxu0 0.0
    %1154 = vmatprep.subr.mxu0 0.0
    %1155 = vmatpush1.msra.mxu0 0.0
    %1156 = vmatprep.subr.mxu0 0.0
    %1157 = vmatpush1.msra.mxu0 0.0
    %1158 = vmatprep.subr.mxu0 0.0
    %1159 = vmatpush1.msra.mxu0 0.0
    %1160 = vmatprep.subr.mxu0 0.0
    %1161 = vmatpush1.msra.mxu0 0.0
    %1162 = vmatprep.subr.mxu0 0.0
    %1163 = vmatpush1.msra.mxu0 %v1134
    %1164 = vmatprep.subr.mxu0 0.0
    %1165 = vmatpush1.msra.mxu0 %v1125
    %1166 = vmatprep.subr.mxu0 0.0
    %1167 = vmatpush1.msra.mxu0 %v1120
    %1168 = vmatprep.subr.mxu0 0.0
    %1169 = vmatpush2.msra.mxu0 0.0
    %1170 = vmatprep.subr.mxu0 0.0
    %1171 = vmatpush2.msra.mxu0 0.0
    %1172 = vmatprep.subr.mxu0 0.0
    %1173 = vmatpush2.msra.mxu0 0.0
    %1174 = vmatprep.subr.mxu0 0.0
    %1175 = vmatpush2.msra.mxu0 0.0
    %1176 = vmatprep.subr.mxu0 0.0
    %1177 = vmatpush2.msra.mxu0 0.0
    %1178 = vmatprep.subr.mxu0 0.0
    %1179 = vmatpush2.msra.mxu0 0.0
    %1180 = vmatprep.subr.mxu0 0.0
    %1181 = vmatpush2.msra.mxu0 0.0
    %1182 = vmatprep.subr.mxu0 0.0
    %1183 = vmatpush2.msra.mxu0 0.0
    %1184 = vmatprep.subr.mxu0 0.0
    %1185 = vmatpush2.msra.mxu0 0.0
    %1186 = vmatprep.subr.mxu0 0.0
    %1187 = vmatpush2.msra.mxu0 0.0
    %1188 = vmatprep.subr.mxu0 0.0
    %1189 = vmatpush2.msra.mxu0 0.0
    %1190 = vmatprep.subr.mxu0 0.0
    %1191 = vmatpush2.msra.mxu0 0.0
    %1192 = vmatprep.subr.mxu0 0.0
    %1193 = vmatpush2.msra.mxu0 0.0
    %1194 = vmatprep.subr.mxu0 0.0
    %1195 = vmatpush2.msra.mxu0 0.0
    %1196 = vmatprep.subr.mxu0 0.0
    %1197 = vmatpush2.msra.mxu0 0.0
    %1198 = vmatprep.subr.mxu0 0.0
    %1199 = vmatpush2.msra.mxu0 0.0
    %1200 = vmatprep.mubr.f32.mxu0 0.0
    %1201 = vmatmul.mubr.f32.gmra.mxu0 %v117
    %v1202 = vpop.f32.mrf.mxu0
    %v1203 = vadd.f32 0.0, %v1202
    %v1204 = vpop.f32.mrf.mxu0
    %1205 = vdwg.mxu0
    %v1206 = vmul.f32 %v1203, 0.11111111
    %s1207 = scalar_lea.vmem [#allocation2], 48
    %1208 = vst.msk [vmem:[%s1207] sm:$0xff] %vm193, %v1206
    %s1209 = scalar_lea.vmem %s0, 168
    %v1210 = vld [vmem:[%s1209] sm:$0xff]
    %v1211 = vld [vmem:[%s1209 + $0x8] sm:$0xff]
    %v1212 = vld [vmem:[%s1209 + $0x10] sm:$0x3]
    %v1214 = vsel %vm22, %v1210, 0
    %v1217 = vsel %vm22, %v1211, 0
    %v1220 = vsel %vm22, %v1212, 0
    %1222 = vmatprep.subr.mxu0 0.0
    %1223 = vmatpush1.msra.mxu0 0.0
    %1224 = vmatprep.subr.mxu0 0.0
    %1225 = vmatpush1.msra.mxu0 0.0
    %1226 = vmatprep.subr.mxu0 0.0
    %1227 = vmatpush1.msra.mxu0 0.0
    %1228 = vmatprep.subr.mxu0 0.0
    %1229 = vmatpush1.msra.mxu0 0.0
    %1230 = vmatprep.subr.mxu0 0.0
    %1231 = vmatpush1.msra.mxu0 0.0
    %1232 = vmatprep.subr.mxu0 0.0
    %1233 = vmatpush1.msra.mxu0 0.0
    %1234 = vmatprep.subr.mxu0 0.0
    %1235 = vmatpush1.msra.mxu0 0.0
    %1236 = vmatprep.subr.mxu0 0.0
    %1237 = vmatpush1.msra.mxu0 0.0
    %1238 = vmatprep.subr.mxu0 0.0
    %1239 = vmatpush1.msra.mxu0 0.0
    %1240 = vmatprep.subr.mxu0 0.0
    %1241 = vmatpush1.msra.mxu0 0.0
    %1242 = vmatprep.subr.mxu0 0.0
    %1243 = vmatpush1.msra.mxu0 0.0
    %1244 = vmatprep.subr.mxu0 0.0
    %1245 = vmatpush1.msra.mxu0 0.0
    %1246 = vmatprep.subr.mxu0 0.0
    %1247 = vmatpush1.msra.mxu0 0.0
    %1248 = vmatprep.subr.mxu0 0.0
    %1249 = vmatpush1.msra.mxu0 %v34
    %1250 = vmatprep.subr.mxu0 0.0
    %1251 = vmatpush1.msra.mxu0 %v17
    %1252 = vmatprep.subr.mxu0 0.0
    %1253 = vmatpush1.msra.mxu0 %v16
    %1254 = vmatprep.subr.mxu0 0.0
    %1255 = vmatpush2.msra.mxu0 0.0
    %1256 = vmatprep.subr.mxu0 0.0
    %1257 = vmatpush2.msra.mxu0 0.0
    %1258 = vmatprep.subr.mxu0 0.0
    %1259 = vmatpush2.msra.mxu0 0.0
    %1260 = vmatprep.subr.mxu0 0.0
    %1261 = vmatpush2.msra.mxu0 0.0
    %1262 = vmatprep.subr.mxu0 0.0
    %1263 = vmatpush2.msra.mxu0 0.0
    %1264 = vmatprep.subr.mxu0 0.0
    %1265 = vmatpush2.msra.mxu0 0.0
    %1266 = vmatprep.subr.mxu0 0.0
    %1267 = vmatpush2.msra.mxu0 0.0
    %1268 = vmatprep.subr.mxu0 0.0
    %1269 = vmatpush2.msra.mxu0 0.0
    %1270 = vmatprep.subr.mxu0 0.0
    %1271 = vmatpush2.msra.mxu0 0.0
    %1272 = vmatprep.subr.mxu0 0.0
    %1273 = vmatpush2.msra.mxu0 0.0
    %1274 = vmatprep.subr.mxu0 0.0
    %1275 = vmatpush2.msra.mxu0 0.0
    %1276 = vmatprep.subr.mxu0 0.0
    %1277 = vmatpush2.msra.mxu0 0.0
    %1278 = vmatprep.subr.mxu0 0.0
    %1279 = vmatpush2.msra.mxu0 0.0
    %1280 = vmatprep.subr.mxu0 0.0
    %1281 = vmatpush2.msra.mxu0 0.0
    %1282 = vmatprep.subr.mxu0 0.0
    %1283 = vmatpush2.msra.mxu0 0.0
    %1284 = vmatprep.subr.mxu0 0.0
    %1285 = vmatpush2.msra.mxu0 0.0
    %1286 = vmatprep.mubr.f32.mxu0 0.0
    %1287 = vmatmul.mubr.f32.gmra.mxu0 %v1214
    %v1288 = vpop.f32.mrf.mxu0
    %v1289 = vadd.f32 0.0, %v1288
    %v1290 = vpop.f32.mrf.mxu0
    %1291 = vmatprep.mubr.f32.mxu0 0.0
    %1292 = vmatmul.mubr.f32.gmra.mxu0 %v1217
    %v1293 = vpop.f32.mrf.mxu0
    %v1294 = vadd.f32 0.0, %v1293
    %v1295 = vpop.f32.mrf.mxu0
    %1296 = vmatprep.mubr.f32.mxu0 0.0
    %1297 = vmatmul.mubr.f32.gmra.mxu0 %v1220
    %v1298 = vpop.f32.mrf.mxu0
    %v1299 = vadd.f32 0.0, %v1298
    %v1300 = vpop.f32.mrf.mxu0
    %1301 = vdwg.mxu0
    %v1303 = vsel %vm32, %v1299, 0
    %1305 = vmatprep.subr.mxu0 0.0
    %1306 = vmatpush1.msra.mxu0 0.0
    %1307 = vmatprep.subr.mxu0 0.0
    %1308 = vmatpush1.msra.mxu0 0.0
    %1309 = vmatprep.subr.mxu0 0.0
    %1310 = vmatpush1.msra.mxu0 0.0
    %1311 = vmatprep.subr.mxu0 0.0
    %1312 = vmatpush1.msra.mxu0 0.0
    %1313 = vmatprep.subr.mxu0 0.0
    %1314 = vmatpush1.msra.mxu0 0.0
    %1315 = vmatprep.subr.mxu0 0.0
    %1316 = vmatpush1.msra.mxu0 0.0
    %1317 = vmatprep.subr.mxu0 0.0
    %1318 = vmatpush1.msra.mxu0 0.0
    %1319 = vmatprep.subr.mxu0 0.0
    %1320 = vmatpush1.msra.mxu0 0.0
    %1321 = vmatprep.subr.mxu0 0.0
    %1322 = vmatpush1.msra.mxu0 0.0
    %1323 = vmatprep.subr.mxu0 0.0
    %1324 = vmatpush1.msra.mxu0 0.0
    %1325 = vmatprep.subr.mxu0 0.0
    %1326 = vmatpush1.msra.mxu0 0.0
    %1327 = vmatprep.subr.mxu0 0.0
    %1328 = vmatpush1.msra.mxu0 0.0
    %1329 = vmatprep.subr.mxu0 0.0
    %1330 = vmatpush1.msra.mxu0 0.0
    %1331 = vmatprep.subr.mxu0 0.0
    %1332 = vmatpush1.msra.mxu0 %v1303
    %1333 = vmatprep.subr.mxu0 0.0
    %1334 = vmatpush1.msra.mxu0 %v1294
    %1335 = vmatprep.subr.mxu0 0.0
    %1336 = vmatpush1.msra.mxu0 %v1289
    %1337 = vmatprep.subr.mxu0 0.0
    %1338 = vmatpush2.msra.mxu0 0.0
    %1339 = vmatprep.subr.mxu0 0.0
    %1340 = vmatpush2.msra.mxu0 0.0
    %1341 = vmatprep.subr.mxu0 0.0
    %1342 = vmatpush2.msra.mxu0 0.0
    %1343 = vmatprep.subr.mxu0 0.0
    %1344 = vmatpush2.msra.mxu0 0.0
    %1345 = vmatprep.subr.mxu0 0.0
    %1346 = vmatpush2.msra.mxu0 0.0
    %1347 = vmatprep.subr.mxu0 0.0
    %1348 = vmatpush2.msra.mxu0 0.0
    %1349 = vmatprep.subr.mxu0 0.0
    %1350 = vmatpush2.msra.mxu0 0.0
    %1351 = vmatprep.subr.mxu0 0.0
    %1352 = vmatpush2.msra.mxu0 0.0
    %1353 = vmatprep.subr.mxu0 0.0
    %1354 = vmatpush2.msra.mxu0 0.0
    %1355 = vmatprep.subr.mxu0 0.0
    %1356 = vmatpush2.msra.mxu0 0.0
    %1357 = vmatprep.subr.mxu0 0.0
    %1358 = vmatpush2.msra.mxu0 0.0
    %1359 = vmatprep.subr.mxu0 0.0
    %1360 = vmatpush2.msra.mxu0 0.0
    %1361 = vmatprep.subr.mxu0 0.0
    %1362 = vmatpush2.msra.mxu0 0.0
    %1363 = vmatprep.subr.mxu0 0.0
    %1364 = vmatpush2.msra.mxu0 0.0
    %1365 = vmatprep.subr.mxu0 0.0
    %1366 = vmatpush2.msra.mxu0 0.0
    %1367 = vmatprep.subr.mxu0 0.0
    %1368 = vmatpush2.msra.mxu0 0.0
    %1369 = vmatprep.mubr.f32.mxu0 0.0
    %1370 = vmatmul.mubr.f32.gmra.mxu0 %v117
    %v1371 = vpop.f32.mrf.mxu0
    %v1372 = vadd.f32 0.0, %v1371
    %v1373 = vpop.f32.mrf.mxu0
    %1374 = vdwg.mxu0
    %v1375 = vmul.f32 %v1372, 0.11111111
    %s1376 = scalar_lea.vmem [#allocation2], 56
    %1377 = vst.msk [vmem:[%s1376] sm:$0xff] %vm193, %v1375
    // Predicated region
    $region14: #{tpu_custom_call.1} parent=1 // pred_check
      _
    $region15: #{tpu_custom_call.1} parent=1 // pred_check_branch
      %1379 = sbr.rel (0) target = $region17
    $region16: #{tpu_custom_call.1} parent=1 // pred_region
      %s1381 = ssub.s32 1024, 1024
      %1382 = vsyncadd [#allocation3], %s1381
      %s1383 = sshll.u32 [#allocation2], 4
      %s1384 = int_to_ptr.vmem [resolvable:$true] %s1383
      %1389 = dma.vmem_to_hbm [thread:$0]  %s1384, 1024, %s3, [#allocation3], 128, 128, 8
    $region17: #{tpu_custom_call.1} parent=1 // pred_fallthru
      _
    // Predicated region
    $region18: #{tpu_custom_call.1} parent=1 // pred_check
      _
    $region19: #{tpu_custom_call.1} parent=1 // pred_check_branch
      %1391 = sbr.rel (0) target = $region21
    $region20: #{tpu_custom_call.1} parent=1 // pred_region
      %1392 = dma.done [#allocation3], 1024
    $region21: #{tpu_custom_call.1} parent=1 // pred_fallthru
      _
    %1393 = vsyncpa [#allocation3], 1

</llo_original>
